<compile_context>
chip_gen: v7x
topology: tpu7x:2x2x1
jax: 0.10.0
libtpu: 0.0.40
codegen_flags: <defaults>
</compile_context>

<pallas_src>
import functools

import jax
import jax.numpy as jnp
from jax import lax
from jax.experimental import pallas as pl
from jax.experimental.pallas import tpu as pltpu

LATENT_IMAGE_CHANNELS = 4   # unused: decoder latent_dim == 0
HIDDEN = 32
OUT_CHANNELS = 3
OMEGA = 30.0
MAX_TILE = 8192             # pixels (lanes) per grid step; sweepable 4096-16384
VMEM_LIMIT_BYTES = 32 * 1024 * 1024   # >= v5e's 16 MiB default, <= physical everywhere


def _round_up(x, m):
    return ((x + m - 1) // m) * m


def _tiling(n, max_tile=MAX_TILE):
    """Lane-aligned tile + padded pixel count; prefer >= 2 grid steps (v7x TCs)."""
    n128 = _round_up(n, 128)
    tile = min(max_tile, n128)
    if n128 > 128 and n128 <= tile:
        # Grid would collapse to a single step -> split so both v7x TensorCores
        # (dimension_semantics="parallel") get work.
        tile = _round_up((n128 + 1) // 2, 128)
    n_pad = _round_up(n, tile)
    return tile, n_pad


# --------------------------------------------------------------------------
# Kernels (transposed layout: pixels on the LANE axis -> lane-dense ld/st).
# --------------------------------------------------------------------------

def _decoder_kernel_xyt(pos_ref, t_ref, w1_ref, b1_ref, w2_ref, b2_ref,
                        w3_ref, b3_ref, out_ref):
    """Per-pixel time path (forward()).

    pos_ref : [2, tile]            t_ref  : [1, tile]
    w1_ref  : [HIDDEN, 3]          b1_ref : [HIDDEN, 1]   (OMEGA pre-folded)
    w2_ref  : [HIDDEN, HIDDEN]     b2_ref : [HIDDEN, 1]
    w3_ref  : [OUT, HIDDEN]        b3_ref : [OUT, 1]
    out_ref : [OUT, tile]
    """
    pos = pos_ref[...]
    w1 = w1_ref[...]
    # Layer 1: K is tiny (3) -> VPU broadcast-FMAs.  (If a bundle dump shows the
    # VALU saturated by sin(), move this onto the idle MXU via jnp.dot instead.)
    pre = (w1[:, 0:1] * pos[0:1, :]
           + w1[:, 1:2] * pos[1:2, :]
           + w1[:, 2:3] * t_ref[...])
    h = jnp.sin(pre + b1_ref[...])                     # OMEGA already in w1/b1
    # Layer 2: [H,H] @ [H,tile] on the MXU, lane-dense result.
    h = jnp.sin(jnp.dot(w2_ref[...], h, preferred_element_type=jnp.float32)
                + b2_ref[...])
    # Output layer: [OUT,H] @ [H,tile], lane-dense store.
    out_ref[...] = (jnp.dot(w3_ref[...], h, preferred_element_type=jnp.float32)
                    + b3_ref[...])


def _decoder_kernel_genpos(w1_ref, b1_ref, w2_ref, b2_ref, w3_ref, b3_ref,
                           out_ref, *, width, height, tile):
    """full_image() path: positions generated in-kernel, scalar t folded into b1.

    w1_ref  : [HIDDEN, 2]          b1_ref : [HIDDEN, 1]   (OMEGA + t pre-folded)
    out_ref : [OUT, tile]
    """
    base = pl.program_id(0) * tile
    idx = base + lax.broadcasted_iota(jnp.int32, (1, tile), 1)
    idx_f = idx.astype(jnp.float32)                    # exact for < 2^24 pixels
    y_i = jnp.floor(idx_f / float(width))              # i // width
    x_i = idx_f - y_i * float(width)                   # i %  width
    x = x_i / float(width)
    y = y_i / float(height)

    w1 = w1_ref[...]
    pre = w1[:, 0:1] * x + w1[:, 1:2] * y
    h = jnp.sin(pre + b1_ref[...])
    h = jnp.sin(jnp.dot(w2_ref[...], h, preferred_element_type=jnp.float32)
                + b2_ref[...])
    out_ref[...] = (jnp.dot(w3_ref[...], h, preferred_element_type=jnp.float32)
                    + b3_ref[...])


# --------------------------------------------------------------------------
# pallas_call wrappers
# --------------------------------------------------------------------------

def _cost(n_pad, c_in):
    flops = 2 * n_pad * (c_in * HIDDEN + HIDDEN * HIDDEN + HIDDEN * OUT_CHANNELS)
    transc = 2 * n_pad * HIDDEN
    bytes_acc = 4 * (n_pad * (c_in + OUT_CHANNELS)
                     + HIDDEN * c_in + HIDDEN * HIDDEN + HIDDEN * OUT_CHANNELS
                     + 2 * HIDDEN + OUT_CHANNELS)
    return pl.CostEstimate(flops=int(flops), transcendentals=int(transc),
                           bytes_accessed=int(bytes_acc))


_COMPILER_PARAMS = pltpu.CompilerParams(
    dimension_semantics=("parallel",),
    vmem_limit_bytes=VMEM_LIMIT_BYTES,
)

_FULL = lambda i: (0, 0)   # resident parameter blocks (same tile every step)


def _decoder_pallas_xyt(pos_T, t_T, w1_T, b1_col, w2_T, b2_col, w3_T, b3_col,
                        tile):
    """pos_T: [2, n_pad], t_T: [1, n_pad] -> [OUT_CHANNELS, n_pad] (channel-major)."""
    _, n_pad = pos_T.shape
    grid = (n_pad // tile,)
    return pl.pallas_call(
        _decoder_kernel_xyt,
        out_shape=jax.ShapeDtypeStruct((OUT_CHANNELS, n_pad), jnp.float32),
        grid=grid,
        in_specs=[
            pl.BlockSpec((2, tile), lambda i: (0, i)),         # positions
            pl.BlockSpec((1, tile), lambda i: (0, i)),         # per-pixel time
            pl.BlockSpec((HIDDEN, 3), _FULL),
            pl.BlockSpec((HIDDEN, 1), _FULL),
            pl.BlockSpec((HIDDEN, HIDDEN), _FULL),
            pl.BlockSpec((HIDDEN, 1), _FULL),
            pl.BlockSpec((OUT_CHANNELS, HIDDEN), _FULL),
            pl.BlockSpec((OUT_CHANNELS, 1), _FULL),
        ],
        out_specs=pl.BlockSpec((OUT_CHANNELS, tile), lambda i: (0, i)),
        compiler_params=_COMPILER_PARAMS,
        cost_estimate=_cost(n_pad, c_in=3),
    )(pos_T, t_T, w1_T, b1_col, w2_T, b2_col, w3_T, b3_col)


def _decoder_pallas_genpos(n_pad, tile, width, height,
                           w1xy_T, b1_col, w2_T, b2_col, w3_T, b3_col):
    """No pixel inputs: positions generated in-kernel -> [OUT_CHANNELS, n_pad]."""
    grid = (n_pad // tile,)
    kernel = functools.partial(_decoder_kernel_genpos,
                               width=width, height=height, tile=tile)
    return pl.pallas_call(
        kernel,
        out_shape=jax.ShapeDtypeStruct((OUT_CHANNELS, n_pad), jnp.float32),
        grid=grid,
        in_specs=[
            pl.BlockSpec((HIDDEN, 2), _FULL),
            pl.BlockSpec((HIDDEN, 1), _FULL),
            pl.BlockSpec((HIDDEN, HIDDEN), _FULL),
            pl.BlockSpec((HIDDEN, 1), _FULL),
            pl.BlockSpec((OUT_CHANNELS, HIDDEN), _FULL),
            pl.BlockSpec((OUT_CHANNELS, 1), _FULL),
        ],
        out_specs=pl.BlockSpec((OUT_CHANNELS, tile), lambda i: (0, i)),
        compiler_params=_COMPILER_PARAMS,
        cost_estimate=_cost(n_pad, c_in=0),
    )(w1xy_T, b1_col, w2_T, b2_col, w3_T, b3_col)


# --------------------------------------------------------------------------
# Pure-JAX reference (un-folded parameters) for correctness checks.
# --------------------------------------------------------------------------

def decoder_forward_ref(raw_pos, t, params):
    w1, b1, w2, b2, w3, b3 = params
    inp = jnp.concatenate([raw_pos, t], axis=1)
    h = jnp.sin(OMEGA * (inp @ w1 + b1))
    h = jnp.sin(h @ w2 + b2)
    return h @ w3 + b3


def _xavier_uniform(key, fan_in, fan_out):
    limit = (6.0 / (fan_in + fan_out)) ** 0.5
    return jax.random.uniform(key, (fan_in, fan_out), jnp.float32, -limit, limit)


class VFXNetPallas:
    """JAX/Pallas port of VFXNet (decoder latent_dim = 0)."""

    def __init__(self, height, width, key):
        self.height = height
        self.width = width
        self.output_channels = OUT_CHANNELS
        # raw_pos exactly as in the PyTorch module:
        # row i = (x / width, y / height) with i = y * width + x
        xs = (jnp.tile(jnp.arange(width), height).astype(jnp.float32)
              / width).reshape(-1, 1)
        ys = (jnp.repeat(jnp.arange(height), width).astype(jnp.float32)
              / height).reshape(-1, 1)
        self.raw_pos = jnp.concatenate([xs, ys], axis=1)

        # deterministic parameter init (xavier_uniform weights, zero biases)
        k1, k2, k3 = jax.random.split(key, 3)
        w1 = _xavier_uniform(k1, 3, HIDDEN)
        w2 = _xavier_uniform(k2, HIDDEN, HIDDEN)
        w3 = _xavier_uniform(k3, HIDDEN, OUT_CHANNELS)
        b1 = jnp.zeros((HIDDEN,), jnp.float32)
        b2 = jnp.zeros((HIDDEN,), jnp.float32)
        b3 = jnp.zeros((OUT_CHANNELS,), jnp.float32)
        self.params = (w1, b1, w2, b2, w3, b3)            # [in, out] layout (ref)

        # Transposed, OMEGA-folded parameters for the lane-dense kernel layout.
        # One-time [32,3] rescale -> the per-pixel OMEGA multiply disappears.
        self.w1_T_eff = (OMEGA * w1).T                    # [H, 3]
        self.b1_col_eff = (OMEGA * b1).reshape(-1, 1)     # [H, 1]
        self.w1xy_T_eff = self.w1_T_eff[:, 0:2]           # [H, 2] position part
        self.w1t_col_eff = self.w1_T_eff[:, 2:3]          # [H, 1] time part
        self.w2_T = w2.T
        self.b2_col = b2.reshape(-1, 1)
        self.w3_T = w3.T
        self.b3_col = b3.reshape(-1, 1)

        # Cached transposed + padded position slab (no per-call concat/transpose).
        n = height * width
        self._tile, self._n_pad = _tiling(n)
        pos_T = self.raw_pos.T                            # [2, n]
        if self._n_pad != n:
            pos_T = jnp.pad(pos_T, ((0, 0), (0, self._n_pad - n)))
        self._raw_pos_T_pad = pos_T

    # -- VFXNet.forward (latent_dim == 0 branch) ----------------------------
    def forward(self, raw_pos, control):
        t = control[:, 0:1]
        n = raw_pos.shape[0]
        if raw_pos is self.raw_pos and n == self.height * self.width:
            tile, n_pad = self._tile, self._n_pad
            pos_T = self._raw_pos_T_pad                   # cached, no HBM pass
        else:
            tile, n_pad = _tiling(n)
            pos_T = raw_pos.T
            if n_pad != n:
                pos_T = jnp.pad(pos_T, ((0, 0), (0, n_pad - n)))
        t_T = t.reshape(1, n)                             # [N,1]->[1,N]: pure reshape
        if n_pad != n:
            t_T = jnp.pad(t_T, ((0, 0), (0, n_pad - n)))
        out_T = _decoder_pallas_xyt(pos_T, t_T, self.w1_T_eff, self.b1_col_eff,
                                    self.w2_T, self.b2_col, self.w3_T,
                                    self.b3_col, tile)
        # TODO(synk): this final transpose is one extra serial HBM round trip;
        # consumers that accept channel-major [C, N] should take out_T directly.
        return out_T[:, :n].T

    # -- VFXNet.full_image ---------------------------------------------------
    def _full_image_slab(self, control):
        """Channel-major [OUT_CHANNELS, n_pad] slab (no pixel inputs DMA'd)."""
        t = control[:, 0:1]                               # (1, 1) scalar time
        # Fold the scalar time into the (already OMEGA-folded) layer-1 bias.
        b1_eff = t[0, 0] * self.w1t_col_eff + self.b1_col_eff   # [H, 1]
        return _decoder_pallas_genpos(self._n_pad, self._tile, self.width,
                                      self.height, self.w1xy_T_eff, b1_eff,
                                      self.w2_T, self.b2_col, self.w3_T,
                                      self.b3_col)

    def full_image(self, control):
        n = self.height * self.width
        out_T = self._full_image_slab(control)
        return out_T[:, :n].T.reshape(self.height, self.width,
                                      self.output_channels)

    def full_image_channel_first(self, control):
        """Transpose-free variant: [OUT_CHANNELS, H, W] straight from the kernel."""
        n = self.height * self.width
        out_T = self._full_image_slab(control)
        return out_T[:, :n].reshape(self.output_channels, self.height, self.width)


if __name__ == "__main__":
    key = jax.random.PRNGKey(0)
    k_params, k_ctrl = jax.random.split(key)

    height, width = 16, 16                     # N = 256 pixels -> grid of 2 steps
    net = VFXNetPallas(height, width, k_params)

    n = height * width
    control = jax.random.uniform(k_ctrl, (n, 2), jnp.float32)   # col 0 = time

    # forward(): per-pixel time
    out = jax.block_until_ready(net.forward(net.raw_pos, control))
    assert out.shape == (n, OUT_CHANNELS)
    ref = decoder_forward_ref(net.raw_pos, control[:, 0:1], net.params)
    # sin() of ~30-rad arguments can differ slightly between Mosaic and XLA
    # argument reduction; 1e-3 covers it.
    assert jnp.allclose(out, ref, atol=1e-3, rtol=1e-3), \
        float(jnp.max(jnp.abs(out - ref)))

    # full_image(): scalar time, in-kernel position generation
    img = jax.block_until_ready(net.full_image(control[0:1]))
    assert img.shape == (height, width, OUT_CHANNELS)
    t0 = control[0:1, 0:1]
    ref_img = decoder_forward_ref(
        net.raw_pos, jnp.broadcast_to(t0, (n, 1)), net.params
    ).reshape(height, width, OUT_CHANNELS)
    assert jnp.allclose(img, ref_img, atol=1e-3, rtol=1e-3), \
        float(jnp.max(jnp.abs(img - ref_img)))

    # transpose-free channel-first slab matches too
    img_cf = jax.block_until_ready(net.full_image_channel_first(control[0:1]))
    assert img_cf.shape == (OUT_CHANNELS, height, width)
    assert jnp.allclose(jnp.transpose(img_cf, (1, 2, 0)), ref_img,
                        atol=1e-3, rtol=1e-3)

    print("KERNEL_OK")
</pallas_src>

<mosaic_0001>
module attributes {stable_mosaic.version = 11 : i64} {
  func.func @_decoder_kernel_xyt(%arg0: i32, %arg1: memref<2x128xf32, #tpu.memory_space<vmem>>, %arg2: memref<1x128xf32, #tpu.memory_space<vmem>>, %arg3: memref<32x3xf32, #tpu.memory_space<vmem>>, %arg4: memref<32x1xf32, #tpu.memory_space<vmem>>, %arg5: memref<32x32xf32, #tpu.memory_space<vmem>>, %arg6: memref<32x1xf32, #tpu.memory_space<vmem>>, %arg7: memref<3x32xf32, #tpu.memory_space<vmem>>, %arg8: memref<3x1xf32, #tpu.memory_space<vmem>>, %arg9: memref<3x128xf32, #tpu.memory_space<vmem>>) attributes {dimension_semantics = [#tpu.dimension_semantics<parallel>], iteration_bounds = array<i64: 2>, scalar_prefetch = 0 : i64, scratch_operands = 0 : i64, tpu.core_type = #tpu.core_type<tc>, window_params = [{transform_indices = @transform_0, window_bounds = array<i64: 2, 128>}, {transform_indices = @transform_1, window_bounds = array<i64: 1, 128>}, {pipeline_mode = #tpu.pipeline_mode<synchronous>, transform_indices = @transform_2, window_bounds = array<i64: 32, 3>}, {pipeline_mode = #tpu.pipeline_mode<synchronous>, transform_indices = @transform_3, window_bounds = array<i64: 32, 1>}, {pipeline_mode = #tpu.pipeline_mode<synchronous>, transform_indices = @transform_4, window_bounds = array<i64: 32, 32>}, {pipeline_mode = #tpu.pipeline_mode<synchronous>, transform_indices = @transform_5, window_bounds = array<i64: 32, 1>}, {pipeline_mode = #tpu.pipeline_mode<synchronous>, transform_indices = @transform_6, window_bounds = array<i64: 3, 32>}, {pipeline_mode = #tpu.pipeline_mode<synchronous>, transform_indices = @transform_7, window_bounds = array<i64: 3, 1>}, {transform_indices = @transform_8, window_bounds = array<i64: 3, 128>}]} {
    %c0 = arith.constant 0 : index
    %c0_0 = arith.constant 0 : index
    %0 = vector.load %arg1[%c0, %c0_0] : memref<2x128xf32, #tpu.memory_space<vmem>>, vector<2x128xf32>
    %c0_1 = arith.constant 0 : index
    %c0_2 = arith.constant 0 : index
    %1 = vector.load %arg3[%c0_1, %c0_2] : memref<32x3xf32, #tpu.memory_space<vmem>>, vector<32x3xf32>
    %2 = vector.extract_strided_slice %1 {offsets = [0, 0], sizes = [32, 1], strides = [1, 1]} : vector<32x3xf32> to vector<32x1xf32>
    %3 = vector.extract_strided_slice %0 {offsets = [0, 0], sizes = [1, 128], strides = [1, 1]} : vector<2x128xf32> to vector<1x128xf32>
    %4 = vector.broadcast %2 : vector<32x1xf32> to vector<32x128xf32>
    %5 = vector.broadcast %3 : vector<1x128xf32> to vector<32x128xf32>
    %6 = arith.mulf %4, %5 : vector<32x128xf32>
    %7 = vector.extract_strided_slice %1 {offsets = [0, 1], sizes = [32, 1], strides = [1, 1]} : vector<32x3xf32> to vector<32x1xf32>
    %8 = vector.extract_strided_slice %0 {offsets = [1, 0], sizes = [1, 128], strides = [1, 1]} : vector<2x128xf32> to vector<1x128xf32>
    %9 = vector.broadcast %7 : vector<32x1xf32> to vector<32x128xf32>
    %10 = vector.broadcast %8 : vector<1x128xf32> to vector<32x128xf32>
    %11 = arith.mulf %9, %10 : vector<32x128xf32>
    %12 = arith.addf %6, %11 : vector<32x128xf32>
    %13 = vector.extract_strided_slice %1 {offsets = [0, 2], sizes = [32, 1], strides = [1, 1]} : vector<32x3xf32> to vector<32x1xf32>
    %c0_3 = arith.constant 0 : index
    %c0_4 = arith.constant 0 : index
    %14 = vector.load %arg2[%c0_3, %c0_4] : memref<1x128xf32, #tpu.memory_space<vmem>>, vector<1x128xf32>
    %15 = vector.broadcast %13 : vector<32x1xf32> to vector<32x128xf32>
    %16 = vector.broadcast %14 : vector<1x128xf32> to vector<32x128xf32>
    %17 = arith.mulf %15, %16 : vector<32x128xf32>
    %18 = arith.addf %12, %17 : vector<32x128xf32>
    %c0_5 = arith.constant 0 : index
    %c0_6 = arith.constant 0 : index
    %19 = vector.load %arg4[%c0_5, %c0_6] : memref<32x1xf32, #tpu.memory_space<vmem>>, vector<32x1xf32>
    %20 = vector.broadcast %19 : vector<32x1xf32> to vector<32x128xf32>
    %21 = arith.addf %18, %20 : vector<32x128xf32>
    %22 = math.sin %21 : vector<32x128xf32>
    %c0_7 = arith.constant 0 : index
    %c0_8 = arith.constant 0 : index
    %23 = vector.load %arg5[%c0_7, %c0_8] : memref<32x32xf32, #tpu.memory_space<vmem>>, vector<32x32xf32>
    %cst = arith.constant dense<0.000000e+00> : vector<32x128xf32>
    %24 = tpu.matmul %23, %22, %cst {dimension_numbers = #tpu.dot_dimension_numbers<[1], [0], [0], [1], [0, 0, 1, 1], [], []>} : vector<32x32xf32>, vector<32x128xf32>, vector<32x128xf32> -> vector<32x128xf32>
    %c0_9 = arith.constant 0 : index
    %c0_10 = arith.constant 0 : index
    %25 = vector.load %arg6[%c0_9, %c0_10] : memref<32x1xf32, #tpu.memory_space<vmem>>, vector<32x1xf32>
    %26 = vector.broadcast %25 : vector<32x1xf32> to vector<32x128xf32>
    %27 = arith.addf %24, %26 : vector<32x128xf32>
    %28 = math.sin %27 : vector<32x128xf32>
    %c0_11 = arith.constant 0 : index
    %c0_12 = arith.constant 0 : index
    %29 = vector.load %arg7[%c0_11, %c0_12] : memref<3x32xf32, #tpu.memory_space<vmem>>, vector<3x32xf32>
    %cst_13 = arith.constant dense<0.000000e+00> : vector<3x128xf32>
    %30 = tpu.matmul %29, %28, %cst_13 {dimension_numbers = #tpu.dot_dimension_numbers<[1], [0], [0], [1], [0, 0, 1, 1], [], []>} : vector<3x32xf32>, vector<32x128xf32>, vector<3x128xf32> -> vector<3x128xf32>
    %c0_14 = arith.constant 0 : index
    %c0_15 = arith.constant 0 : index
    %31 = vector.load %arg8[%c0_14, %c0_15] : memref<3x1xf32, #tpu.memory_space<vmem>>, vector<3x1xf32>
    %32 = vector.broadcast %31 : vector<3x1xf32> to vector<3x128xf32>
    %33 = arith.addf %30, %32 : vector<3x128xf32>
    %c0_16 = arith.constant 0 : index
    %c0_17 = arith.constant 0 : index
    %34 = vector.load %arg9[%c0_16, %c0_17] : memref<3x128xf32, #tpu.memory_space<vmem>>, vector<3x128xf32>
    tpu.vector_store %arg9[%c0_16, %c0_17], %33 {strides = array<i32>} : memref<3x128xf32, #tpu.memory_space<vmem>>, vector<3x128xf32>,
    return
  }
  func.func @transform_0(%arg0: i32) -> (i32, i32) {
    %c0_i32 = arith.constant 0 : i32
    %c0_i32_0 = arith.constant 0 : i32
    return %c0_i32, %arg0 : i32, i32
  }
  func.func @transform_1(%arg0: i32) -> (i32, i32) {
    %c0_i32 = arith.constant 0 : i32
    %c0_i32_0 = arith.constant 0 : i32
    return %c0_i32, %arg0 : i32, i32
  }
  func.func @transform_2(%arg0: i32) -> (i32, i32) {
    %c0_i32 = arith.constant 0 : i32
    %c0_i32_0 = arith.constant 0 : i32
    %c0_i32_1 = arith.constant 0 : i32
    return %c0_i32, %c0_i32_0 : i32, i32
  }
  func.func @transform_3(%arg0: i32) -> (i32, i32) {
    %c0_i32 = arith.constant 0 : i32
    %c0_i32_0 = arith.constant 0 : i32
    %c0_i32_1 = arith.constant 0 : i32
    return %c0_i32, %c0_i32_0 : i32, i32
  }
  func.func @transform_4(%arg0: i32) -> (i32, i32) {
    %c0_i32 = arith.constant 0 : i32
    %c0_i32_0 = arith.constant 0 : i32
    %c0_i32_1 = arith.constant 0 : i32
    return %c0_i32, %c0_i32_0 : i32, i32
  }
  func.func @transform_5(%arg0: i32) -> (i32, i32) {
    %c0_i32 = arith.constant 0 : i32
    %c0_i32_0 = arith.constant 0 : i32
    %c0_i32_1 = arith.constant 0 : i32
    return %c0_i32, %c0_i32_0 : i32, i32
  }
  func.func @transform_6(%arg0: i32) -> (i32, i32) {
    %c0_i32 = arith.constant 0 : i32
    %c0_i32_0 = arith.constant 0 : i32
    %c0_i32_1 = arith.constant 0 : i32
    return %c0_i32, %c0_i32_0 : i32, i32
  }
  func.func @transform_7(%arg0: i32) -> (i32, i32) {
    %c0_i32 = arith.constant 0 : i32
    %c0_i32_0 = arith.constant 0 : i32
    %c0_i32_1 = arith.constant 0 : i32
    return %c0_i32, %c0_i32_0 : i32, i32
  }
  func.func @transform_8(%arg0: i32) -> (i32, i32) {
    %c0_i32 = arith.constant 0 : i32
    %c0_i32_0 = arith.constant 0 : i32
    return %c0_i32, %arg0 : i32, i32
  }
}

</mosaic_0001>

<llo_original>
// kernel: tpu_custom_call.1
$region0: #{tpu_custom_call.1}
  #allocation0 [shape = 'u32[]', space=smem, size = 0x4, offset = 0x4, fixed_abs, tag = 'smem constant byte address 0x4 - core index']
  #allocation1 [shape = 'u32[144,128]{1,0:T(1,128)}', space=vmem, size = 0x12000, scoped, tag = 'internal scratch']
  %s0 = inlined_call_operand.vmem [shape: f32[2,256], index: 0, kind: input, shape index: {}]
  %s1 = inlined_call_operand.vmem [shape: f32[1,256], index: 1, kind: input, shape index: {}]
  %s2 = inlined_call_operand.vmem [shape: f32[32,3], index: 2, kind: input, shape index: {}]
  %s3 = inlined_call_operand.vmem [shape: f32[32,1], index: 3, kind: input, shape index: {}]
  %s4 = inlined_call_operand.vmem [shape: f32[32,32], index: 4, kind: input, shape index: {}]
  %s5 = inlined_call_operand.vmem [shape: f32[32,1], index: 5, kind: input, shape index: {}]
  %s6 = inlined_call_operand.vmem [shape: f32[3,32], index: 6, kind: input, shape index: {}]
  %s7 = inlined_call_operand.vmem [shape: f32[3,1], index: 7, kind: input, shape index: {}]
  %s8 = inlined_call_operand.hbm [shape: f32[3,256], index: 8, kind: output, shape index: {}]
  %s9 = sld [smem:[#allocation0]]
  $region65: #{tpu_custom_call.1} parent=0
    _
  %s11 = ssub.s32 1, %s9
  %s12 = scalar_select 0, %s11, %s9
  $region1: #{tpu_custom_call.1} parent=0
    #allocation2 [shape = 'u8[4096]{0}', space=vmem, size = 0x1000, scoped, tag = 'output window, operand 0']
    #allocation3 [shape = 's32[2]{0}', space=sflag, size = 0x8, scoped, tag = 'scoped memory for tpu_custom_call.1']
    %13 = vsyncpa [#allocation3], 0
    %s14 = scalar_lea.sflag [#allocation3], 1
    %15 = vsyncpa %s14, 0
    loop: start=0, step=1, limit=4
    $region2: #{tpu_custom_call.1} parent=1 // loop_pre_header
      _
    $region3: #{tpu_custom_call.1} parent=1 // loop_header
      %s17 = sphi 0, %s21
      %p18 = scmp.ge.s32.totalorder %s17, 4
      %s27 = sphi 0, %s29
      %s30 = sphi 0, %s27
      %s31 = sphi 0, %s30
      %s47 = sphi 0, %s31
      %s53 = sphi 0, %s55
      %s56 = sphi 0, %s53
      %s57 = sphi 0, %s56
      %s73 = sphi 0, %s57
      %s77 = sphi 0, %s77
      %s79 = sphi 0, %s77
      %s80 = sphi 0, %s79
      %s94 = sphi 0, %s80
      %s98 = sphi 0, %s98
      %s100 = sphi 0, %s98
      %s101 = sphi 0, %s100
      %s115 = sphi 0, %s101
      %s119 = sphi 0, %s119
      %s121 = sphi 0, %s119
      %s122 = sphi 0, %s121
      %s136 = sphi 0, %s122
      %s140 = sphi 0, %s140
      %s142 = sphi 0, %s140
      %s143 = sphi 0, %s142
      %s157 = sphi 0, %s143
      %s161 = sphi 0, %s161
      %s163 = sphi 0, %s161
      %s164 = sphi 0, %s163
      %s178 = sphi 0, %s164
      %s182 = sphi 0, %s182
      %s184 = sphi 0, %s182
      %s185 = sphi 0, %s184
      %s199 = sphi 0, %s185
      %s205 = sphi 0, %s207
      %s208 = sphi 0, %s205
      %s209 = sphi 0, %s208
      %s225 = sphi 0, %s209
    $region4: #{tpu_custom_call.1} parent=1 // loop_header_branch
      %20 = sbr.rel (%p18) target = $region8
    $region5: #{tpu_custom_call.1} parent=1 // loop_body
      %s22 = ssub.s32 %s17, 1
      %s23 = ssub.s32 %s17, 2
      %s24 = sadd.s32 %s17, 1
      %s25 = ssub.s32 %s17, %s24
      %p26 = scmp.eq.s32.totalorder %s25, 0
      %s28 = sadd.s32 %s27, 1
      %s29 = scalar_select %p26, %s27, %s28
      %p32 = pneg %p26
      %p33 = scmp.eq.s32.totalorder %s17, 1
      %p34 = por %p32, %p33
      %p35 = scmp.ne.s32.totalorder %s27, %s30
      %p36 = scmp.eq.s32.totalorder %s17, 0
      %p37 = por %p35, %p36
      %p38 = scmp.ne.s32.totalorder %s27, %s30
      %p39 = scmp.eq.s32.totalorder %s22, 1
      %p40 = por %p38, %p39
      %p41 = scmp.ne.s32.totalorder %s30, %s31
      %p42 = scmp.eq.s32.totalorder %s22, 0
      %p43 = por %p41, %p42
      %p44 = scmp.ne.s32.totalorder %s30, %s31
      %p45 = scmp.eq.s32.totalorder %s23, 1
      %p46 = por %p44, %p45
      %p48 = scmp.ne.s32.totalorder %s31, %s47
      %p49 = scmp.eq.s32.totalorder %s23, 0
      %p50 = por %p48, %p49
      %s51 = ssub.s32 %s17, %s24
      %p52 = scmp.eq.s32.totalorder %s51, 0
      %s54 = sadd.s32 %s53, 1
      %s55 = scalar_select %p52, %s53, %s54
      %p58 = pneg %p52
      %p59 = scmp.eq.s32.totalorder %s17, 1
      %p60 = por %p58, %p59
      %p61 = scmp.ne.s32.totalorder %s53, %s56
      %p62 = scmp.eq.s32.totalorder %s17, 0
      %p63 = por %p61, %p62
      %p64 = scmp.ne.s32.totalorder %s53, %s56
      %p65 = scmp.eq.s32.totalorder %s22, 1
      %p66 = por %p64, %p65
      %p67 = scmp.ne.s32.totalorder %s56, %s57
      %p68 = scmp.eq.s32.totalorder %s22, 0
      %p69 = por %p67, %p68
      %p70 = scmp.ne.s32.totalorder %s56, %s57
      %p71 = scmp.eq.s32.totalorder %s23, 1
      %p72 = por %p70, %p71
      %p74 = scmp.ne.s32.totalorder %s57, %s73
      %p75 = scmp.eq.s32.totalorder %s23, 0
      %p76 = por %p74, %p75
      %s78 = sadd.s32 %s77, 1
      %p81 = scmp.eq.s32.totalorder %s17, 1
      %p82 = scmp.ne.s32.totalorder %s77, %s79
      %p83 = scmp.eq.s32.totalorder %s17, 0
      %p84 = por %p82, %p83
      %p85 = scmp.ne.s32.totalorder %s77, %s79
      %p86 = scmp.eq.s32.totalorder %s22, 1
      %p87 = por %p85, %p86
      %p88 = scmp.ne.s32.totalorder %s79, %s80
      %p89 = scmp.eq.s32.totalorder %s22, 0
      %p90 = por %p88, %p89
      %p91 = scmp.ne.s32.totalorder %s79, %s80
      %p92 = scmp.eq.s32.totalorder %s23, 1
      %p93 = por %p91, %p92
      %p95 = scmp.ne.s32.totalorder %s80, %s94
      %p96 = scmp.eq.s32.totalorder %s23, 0
      %p97 = por %p95, %p96
      %s99 = sadd.s32 %s98, 1
      %p102 = scmp.eq.s32.totalorder %s17, 1
      %p103 = scmp.ne.s32.totalorder %s98, %s100
      %p104 = scmp.eq.s32.totalorder %s17, 0
      %p105 = por %p103, %p104
      %p106 = scmp.ne.s32.totalorder %s98, %s100
      %p107 = scmp.eq.s32.totalorder %s22, 1
      %p108 = por %p106, %p107
      %p109 = scmp.ne.s32.totalorder %s100, %s101
      %p110 = scmp.eq.s32.totalorder %s22, 0
      %p111 = por %p109, %p110
      %p112 = scmp.ne.s32.totalorder %s100, %s101
      %p113 = scmp.eq.s32.totalorder %s23, 1
      %p114 = por %p112, %p113
      %p116 = scmp.ne.s32.totalorder %s101, %s115
      %p117 = scmp.eq.s32.totalorder %s23, 0
      %p118 = por %p116, %p117
      %s120 = sadd.s32 %s119, 1
      %p123 = scmp.eq.s32.totalorder %s17, 1
      %p124 = scmp.ne.s32.totalorder %s119, %s121
      %p125 = scmp.eq.s32.totalorder %s17, 0
      %p126 = por %p124, %p125
      %p127 = scmp.ne.s32.totalorder %s119, %s121
      %p128 = scmp.eq.s32.totalorder %s22, 1
      %p129 = por %p127, %p128
      %p130 = scmp.ne.s32.totalorder %s121, %s122
      %p131 = scmp.eq.s32.totalorder %s22, 0
      %p132 = por %p130, %p131
      %p133 = scmp.ne.s32.totalorder %s121, %s122
      %p134 = scmp.eq.s32.totalorder %s23, 1
      %p135 = por %p133, %p134
      %p137 = scmp.ne.s32.totalorder %s122, %s136
      %p138 = scmp.eq.s32.totalorder %s23, 0
      %p139 = por %p137, %p138
      %s141 = sadd.s32 %s140, 1
      %p144 = scmp.eq.s32.totalorder %s17, 1
      %p145 = scmp.ne.s32.totalorder %s140, %s142
      %p146 = scmp.eq.s32.totalorder %s17, 0
      %p147 = por %p145, %p146
      %p148 = scmp.ne.s32.totalorder %s140, %s142
      %p149 = scmp.eq.s32.totalorder %s22, 1
      %p150 = por %p148, %p149
      %p151 = scmp.ne.s32.totalorder %s142, %s143
      %p152 = scmp.eq.s32.totalorder %s22, 0
      %p153 = por %p151, %p152
      %p154 = scmp.ne.s32.totalorder %s142, %s143
      %p155 = scmp.eq.s32.totalorder %s23, 1
      %p156 = por %p154, %p155
      %p158 = scmp.ne.s32.totalorder %s143, %s157
      %p159 = scmp.eq.s32.totalorder %s23, 0
      %p160 = por %p158, %p159
      %s162 = sadd.s32 %s161, 1
      %p165 = scmp.eq.s32.totalorder %s17, 1
      %p166 = scmp.ne.s32.totalorder %s161, %s163
      %p167 = scmp.eq.s32.totalorder %s17, 0
      %p168 = por %p166, %p167
      %p169 = scmp.ne.s32.totalorder %s161, %s163
      %p170 = scmp.eq.s32.totalorder %s22, 1
      %p171 = por %p169, %p170
      %p172 = scmp.ne.s32.totalorder %s163, %s164
      %p173 = scmp.eq.s32.totalorder %s22, 0
      %p174 = por %p172, %p173
      %p175 = scmp.ne.s32.totalorder %s163, %s164
      %p176 = scmp.eq.s32.totalorder %s23, 1
      %p177 = por %p175, %p176
      %p179 = scmp.ne.s32.totalorder %s164, %s178
      %p180 = scmp.eq.s32.totalorder %s23, 0
      %p181 = por %p179, %p180
      %s183 = sadd.s32 %s182, 1
      %p186 = scmp.eq.s32.totalorder %s17, 1
      %p187 = scmp.ne.s32.totalorder %s182, %s184
      %p188 = scmp.eq.s32.totalorder %s17, 0
      %p189 = por %p187, %p188
      %p190 = scmp.ne.s32.totalorder %s182, %s184
      %p191 = scmp.eq.s32.totalorder %s22, 1
      %p192 = por %p190, %p191
      %p193 = scmp.ne.s32.totalorder %s184, %s185
      %p194 = scmp.eq.s32.totalorder %s22, 0
      %p195 = por %p193, %p194
      %p196 = scmp.ne.s32.totalorder %s184, %s185
      %p197 = scmp.eq.s32.totalorder %s23, 1
      %p198 = por %p196, %p197
      %p200 = scmp.ne.s32.totalorder %s185, %s199
      %p201 = scmp.eq.s32.totalorder %s23, 0
      %p202 = por %p200, %p201
      %s203 = ssub.s32 %s17, %s24
      %p204 = scmp.eq.s32.totalorder %s203, 0
      %s206 = sadd.s32 %s205, 1
      %s207 = scalar_select %p204, %s205, %s206
      %p210 = pneg %p204
      %p211 = scmp.eq.s32.totalorder %s17, 1
      %p212 = por %p210, %p211
      %p213 = scmp.ne.s32.totalorder %s205, %s208
      %p214 = scmp.eq.s32.totalorder %s17, 0
      %p215 = por %p213, %p214
      %p216 = scmp.ne.s32.totalorder %s205, %s208
      %p217 = scmp.eq.s32.totalorder %s22, 1
      %p218 = por %p216, %p217
      %p219 = scmp.ne.s32.totalorder %s208, %s209
      %p220 = scmp.eq.s32.totalorder %s22, 0
      %p221 = por %p219, %p220
      %p222 = scmp.ne.s32.totalorder %s208, %s209
      %p223 = scmp.eq.s32.totalorder %s23, 1
      %p224 = por %p222, %p223
      %p226 = scmp.ne.s32.totalorder %s209, %s225
      %p227 = scmp.eq.s32.totalorder %s23, 0
      %p228 = por %p226, %p227
      %p229 = scmp.le.s32.totalorder 1, %s17
      %p230 = scmp.lt.s32.totalorder %s17, 3
      %p231 = pnand %p229, %p230
      %p232 = pneg %p231
      // Predicated region
      $region9: #{tpu_custom_call.1} parent=5 // pred_check
        _
      $region10: #{tpu_custom_call.1} parent=5 // pred_check_branch
        %234 = sbr.rel (%p231) target = $region12
      $region11: #{tpu_custom_call.1} parent=5 // pred_region
        %s235 = ssub.s32 %s17, 1
        // Predicated region
        $region13: #{tpu_custom_call.1} parent=11 // pred_check
          %p236 = pneg %p90
        $region14: #{tpu_custom_call.1} parent=11 // pred_check_branch
          %238 = sbr.rel (%p236) target = $region16
        $region15: #{tpu_custom_call.1} parent=11 // pred_region
          _
        $region16: #{tpu_custom_call.1} parent=11 // pred_fallthru
          _
        // Predicated region
        $region17: #{tpu_custom_call.1} parent=11 // pred_check
          %p239 = pneg %p111
        $region18: #{tpu_custom_call.1} parent=11 // pred_check_branch
          %241 = sbr.rel (%p239) target = $region20
        $region19: #{tpu_custom_call.1} parent=11 // pred_region
          _
        $region20: #{tpu_custom_call.1} parent=11 // pred_fallthru
          _
        // Predicated region
        $region21: #{tpu_custom_call.1} parent=11 // pred_check
          %p242 = pneg %p132
        $region22: #{tpu_custom_call.1} parent=11 // pred_check_branch
          %244 = sbr.rel (%p242) target = $region24
        $region23: #{tpu_custom_call.1} parent=11 // pred_region
          _
        $region24: #{tpu_custom_call.1} parent=11 // pred_fallthru
          _
        // Predicated region
        $region25: #{tpu_custom_call.1} parent=11 // pred_check
          %p245 = pneg %p153
        $region26: #{tpu_custom_call.1} parent=11 // pred_check_branch
          %247 = sbr.rel (%p245) target = $region28
        $region27: #{tpu_custom_call.1} parent=11 // pred_region
          _
        $region28: #{tpu_custom_call.1} parent=11 // pred_fallthru
          _
        // Predicated region
        $region29: #{tpu_custom_call.1} parent=11 // pred_check
          %p248 = pneg %p174
        $region30: #{tpu_custom_call.1} parent=11 // pred_check_branch
          %250 = sbr.rel (%p248) target = $region32
        $region31: #{tpu_custom_call.1} parent=11 // pred_region
          _
        $region32: #{tpu_custom_call.1} parent=11 // pred_fallthru
          _
        // Predicated region
        $region33: #{tpu_custom_call.1} parent=11 // pred_check
          %p251 = pneg %p195
        $region34: #{tpu_custom_call.1} parent=11 // pred_check_branch
          %253 = sbr.rel (%p251) target = $region36
        $region35: #{tpu_custom_call.1} parent=11 // pred_region
          _
        $region36: #{tpu_custom_call.1} parent=11 // pred_fallthru
          _
      $region12: #{tpu_custom_call.1} parent=5 // pred_fallthru
        _
      %p254 = scmp.lt.s32.totalorder %s17, 2
      // Predicated region
      $region37: #{tpu_custom_call.1} parent=5 // pred_check
        %p255 = pneg %p254
      $region38: #{tpu_custom_call.1} parent=5 // pred_check_branch
        %257 = sbr.rel (%p255) target = $region40
      $region39: #{tpu_custom_call.1} parent=5 // pred_region
        // Predicated region
        $region41: #{tpu_custom_call.1} parent=39 // pred_check
          %p258 = pneg %p37
        $region42: #{tpu_custom_call.1} parent=39 // pred_check_branch
          %260 = sbr.rel (%p258) target = $region44
        $region43: #{tpu_custom_call.1} parent=39 // pred_region
          %p261 = scmp.lt.s32.totalorder %s17, 1
          %s262 = scalar_select %p261, %s17, 1
          %s263 = smul.addr %s262, 2
          %s264 = scalar_lea.vmem %s0, %s263
        $region44: #{tpu_custom_call.1} parent=39 // pred_fallthru
          _
        // Predicated region
        $region45: #{tpu_custom_call.1} parent=39 // pred_check
          %p265 = pneg %p63
        $region46: #{tpu_custom_call.1} parent=39 // pred_check_branch
          %267 = sbr.rel (%p265) target = $region48
        $region47: #{tpu_custom_call.1} parent=39 // pred_region
          %p268 = scmp.lt.s32.totalorder %s17, 1
          %s269 = scalar_select %p268, %s17, 1
          %s270 = scalar_lea.vmem %s1, %s269
        $region48: #{tpu_custom_call.1} parent=39 // pred_fallthru
          _
      $region40: #{tpu_custom_call.1} parent=5 // pred_fallthru
        _
      %p271 = scmp.le.s32.totalorder 1, %s17
      %p272 = scmp.lt.s32.totalorder %s17, 3
      %p273 = pnand %p271, %p272
      %p274 = pneg %p273
      // Predicated region
      $region49: #{tpu_custom_call.1} parent=5 // pred_check
        _
      $region50: #{tpu_custom_call.1} parent=5 // pred_check_branch
        %276 = sbr.rel (%p273) target = $region52
      $region51: #{tpu_custom_call.1} parent=5 // pred_region
        %s277 = ssub.s32 %s17, 1
        %p278 = scmp.lt.s32.totalorder %s22, 1
        %s279 = scalar_select %p278, %s22, 1
        %s280 = smul.addr %s279, 2
        %s281 = scalar_lea.vmem %s0, %s280
        %p282 = pneg %p43
        %p283 = pneg %p40
        %p284 = scmp.lt.s32.totalorder %s22, 1
        %s285 = scalar_select %p284, %s22, 1
        %s286 = scalar_lea.vmem %s1, %s285
        %p287 = pneg %p69
        %p288 = pneg %p66
        %p289 = pneg %p90
        %p290 = pneg %p87
        %p291 = pneg %p111
        %p292 = pneg %p108
        %p293 = pneg %p132
        %p294 = pneg %p129
        %p295 = pneg %p153
        %p296 = pneg %p150
        %p297 = pneg %p174
        %p298 = pneg %p171
        %p299 = pneg %p195
        %p300 = pneg %p192
        %p301 = pneg %p221
        %p302 = pneg %p218
        %s303 = sand.u32 %s208, 1
        %s304 = scalar_lea.sflag [#allocation3], %s303
        %s305 = sand.u32 %s208, 1
        %s306 = smul.addr %s305, 4
        %s307 = scalar_lea.vmem [#allocation2], %s306
        %p308 = scmp.lt.s32.totalorder %s22, 1
        %s309 = scalar_select %p308, %s22, 1
        %s310 = smul.addr %s309, 2
        %s311 = scalar_lea.vmem %s0, %s310
        %p312 = scmp.lt.s32.totalorder %s22, 1
        %s313 = scalar_select %p312, %s22, 1
        %s314 = scalar_lea.vmem %s1, %s313
        %v315 = vld [vmem:[%s311] sm:$0x3]
        %v316 = vld [vmem:[%s2] sm:$0xff]
        %v317 = vld [vmem:[%s2 + $0x8] sm:$0xff]
        %v318 = vld [vmem:[%s2 + $0x10] sm:$0xff]
        %v319 = vld [vmem:[%s2 + $0x18] sm:$0xff]
        %321 = vset.pattern.permute.xlu0 0
        %322 = vperm.xlu0 %321, %v316
        %v323 = vpop.permute.xlu0 %322
        %326 = vset.pattern.permute.xlu0 0
        %327 = vperm.xlu0 %326, %v317
        %v328 = vpop.permute.xlu0 %327
        %331 = vset.pattern.permute.xlu0 0
        %332 = vperm.xlu0 %331, %v318
        %v333 = vpop.permute.xlu0 %332
        %336 = vset.pattern.permute.xlu0 0
        %337 = vperm.xlu0 %336, %v319
        %v338 = vpop.permute.xlu0 %337
        %v340 = vlaneseq
        %v341 = vshrl.u32 %v340, 7
        %v342 = vsub.s32 0, %v341
        %v343 = vrot.slane %v315, %v342
        %v344 = vmul.f32 %v323, %v343
        %v345 = vmul.f32 %v328, %v343
        %v346 = vmul.f32 %v333, %v343
        %v347 = vmul.f32 %v338, %v343
        %348 = vset.pattern.permute.xlu0 1
        %349 = vperm.xlu0 %348, %v316
        %v350 = vpop.permute.xlu0 %349
        %352 = vset.pattern.permute.xlu0 1
        %353 = vperm.xlu0 %352, %v317
        %v354 = vpop.permute.xlu0 %353
        %356 = vset.pattern.permute.xlu0 1
        %357 = vperm.xlu0 %356, %v318
        %v358 = vpop.permute.xlu0 %357
        %360 = vset.pattern.permute.xlu0 1
        %361 = vperm.xlu0 %360, %v319
        %v362 = vpop.permute.xlu0 %361
        %v364 = vlaneseq
        %v365 = vshrl.u32 %v364, 7
        %v366 = vsub.s32 1, %v365
        %v367 = vrot.slane %v315, %v366
        %v368 = vmul.f32 %v350, %v367
        %v369 = vmul.f32 %v354, %v367
        %v370 = vmul.f32 %v358, %v367
        %v371 = vmul.f32 %v362, %v367
        %v372 = vadd.f32 %v344, %v368
        %v373 = vadd.f32 %v345, %v369
        %v374 = vadd.f32 %v346, %v370
        %v375 = vadd.f32 %v347, %v371
        %v376 = vld [vmem:[%s314] sm:$0x1]
        %377 = vset.pattern.permute.xlu0 2
        %378 = vperm.xlu0 %377, %v316
        %v379 = vpop.permute.xlu0 %378
        %381 = vset.pattern.permute.xlu0 2
        %382 = vperm.xlu0 %381, %v317
        %v383 = vpop.permute.xlu0 %382
        %385 = vset.pattern.permute.xlu0 2
        %386 = vperm.xlu0 %385, %v318
        %v387 = vpop.permute.xlu0 %386
        %389 = vset.pattern.permute.xlu0 2
        %390 = vperm.xlu0 %389, %v319
        %v391 = vpop.permute.xlu0 %390
        %v394 = vlaneseq
        %v395 = vshrl.u32 %v394, 7
        %v396 = vsub.s32 0, %v395
        %v397 = vrot.slane %v376, %v396
        %v399 = vmul.f32 %v379, %v397
        %v400 = vmul.f32 %v383, %v397
        %v401 = vmul.f32 %v387, %v397
        %v402 = vmul.f32 %v391, %v397
        %v403 = vadd.f32 %v372, %v399
        %v404 = vadd.f32 %v373, %v400
        %v405 = vadd.f32 %v374, %v401
        %v406 = vadd.f32 %v375, %v402
        %v407 = vld [vmem:[%s3] sm:$0xff]
        %v408 = vld [vmem:[%s3 + $0x8] sm:$0xff]
        %v409 = vld [vmem:[%s3 + $0x10] sm:$0xff]
        %v410 = vld [vmem:[%s3 + $0x18] sm:$0xff]
        %412 = vset.pattern.permute.xlu0 0
        %413 = vperm.xlu0 %412, %v407
        %v414 = vpop.permute.xlu0 %413
        %417 = vset.pattern.permute.xlu0 0
        %418 = vperm.xlu0 %417, %v408
        %v419 = vpop.permute.xlu0 %418
        %422 = vset.pattern.permute.xlu0 0
        %423 = vperm.xlu0 %422, %v409
        %v424 = vpop.permute.xlu0 %423
        %427 = vset.pattern.permute.xlu0 0
        %428 = vperm.xlu0 %427, %v410
        %v429 = vpop.permute.xlu0 %428
        %v431 = vadd.f32 %v403, %v414
        %v432 = vadd.f32 %v404, %v419
        %v433 = vadd.f32 %v405, %v424
        %v434 = vadd.f32 %v406, %v429
        %v435 = vand.u32 2147483647, %v431
        %vm436 = vcmp.le.f32.partialorder %v435, 0.7853982
        %vm437 = vcmp.lt.s32.totalorder %v431, 0
        %v438 = vand.u32 %v431, 2139095040
        %v439 = vshrl.u32 %v438, 23
        %v440 = vsub.s32 %v439, 127
        %v441 = vand.u32 2147483647, %v431
        %v442 = vand.u32 %v441, 8388607
        %v443 = vor.u32 %v442, 8388608
        %v444 = vsub.s32 0, %v443
        %v445 = vadd.s32 %v440, 1
        %vm446 = vcmp.gt.s32.totalorder %v445, 0
        %v447 = vsel %vm446, %v445, 0
        %v448 = vshrl.u32 %v447, 5
        %v449 = vand.u32 %v447, 31
        %v450 = vsub.s32 32, %v449
        %v451 = vshrl.u32 683565275, %v450
        %v452 = vshll.u32 683565275, %v449
        %v453 = vshrl.u32 2475754826, %v450
        %v454 = vor.u32 %v452, %v453
        %v455 = vshll.u32 2475754826, %v449
        %v456 = vshrl.u32 2131351028, %v450
        %v457 = vor.u32 %v455, %v456
        %v458 = vshll.u32 2131351028, %v449
        %v459 = vshrl.u32 2102212464, %v450
        %v460 = vor.u32 %v458, %v459
        %v461 = vshll.u32 2102212464, %v449
        %v462 = vshrl.u32 920167782, %v450
        %v463 = vor.u32 %v461, %v462
        %v464 = vshll.u32 920167782, %v449
        %v465 = vshrl.u32 1326507024, %v450
        %v466 = vor.u32 %v464, %v465
        %vm467 = vcmp.lt.s32.totalorder %v448, 1
        %vm468 = vcmp.lt.s32.totalorder %v448, 2
        %vm469 = vcmp.lt.s32.totalorder %v448, 3
        %vm470 = vcmp.lt.s32.totalorder %v448, 4
        %v471 = vsel %vm467, %v451, %v454
        %v472 = vsel %vm470, %v460, 2102212464
        %v473 = vsel %vm469, %v457, %v472
        %v474 = vsel %vm468, %v471, %v473
        %v475 = vsel %vm467, %v454, %v457
        %v476 = vsel %vm470, %v463, 920167782
        %v477 = vsel %vm469, %v460, %v476
        %v478 = vsel %vm468, %v475, %v477
        %v479 = vsel %vm467, %v457, %v460
        %v480 = vsel %vm470, %v466, 1326507024
        %v481 = vsel %vm469, %v463, %v480
        %v482 = vsel %vm468, %v479, %v481
        %v483 = vshll.u32 %v443, 8
        %v484 = vmul.u32.u64.compose %v483, %v482
        %v485 = vextract.low.u32 %v484
        %v486 = vextract.high.u32 %v484
        %v487 = vmul.u32.u64.compose %v483, %v478
        %v488 = vextract.low.u32 %v487
        %v489 = vextract.high.u32 %v487
        %v490 = vmul.u32 %v483, %v474
        %v491 = vadd.s32 %v486, %v488
        %vm492 = vc.u32 %v486, %v488
        %v493 = vadd.s32 %v489, 1
        %v494 = vsel %vm492, %v493, %v489
        %v495 = vadd.s32 %v490, %v494
        %v496 = vadd.s32 %v495, 536870912
        %v497 = vshrl.u32 %v496, 30
        %v498 = vshll.u32 %v497, 30
        %v499 = vsub.s32 %v495, %v498
        %vm500 = vcmp.lt.s32.totalorder %v499, 0
        %v501 = vsub.s32 0, %v499
        %v502 = vsel %vm500, %v501, %v499
        %v503 = vclz %v502
        %v504 = vsub.s32 %v503, 2
        %vm505 = vcmp.gt.s32.totalorder 0, %v504
        %v506 = vsel %vm505, 0, %v504
        %v507 = vsub.s32 32, %v506
        %v508 = vshll.u32 %v499, %v506
        %v509 = vshrl.u32 %v491, %v507
        %v510 = vor.u32 %v508, %v509
        %v511 = vsub.s32 4294967266, %v506
        %v512 = vadd.s32 %v511, 127
        %v513 = vshll.u32 %v512, 23
        %v514 = vor.u32 4788187, %v513
        %v515 = vand.u32 2147483647, %v514
        %v517 = vcvt.s32.f32 %v510
        %v518 = vmul.f32 %v517, %v515
        %v519 = vxor.u32 %v518, 2147483648
        %v520 = vsel %vm437, %v519, %v518
        %v521 = vsub.s32 4, %v497
        %v522 = vsel %vm437, %v521, %v497
        %v523 = vsel %vm436, %v431, %v520
        %v524 = vsel %vm436, 0, %v522
        %v525 = vcosq.f32.pop %v523
        %v526 = vsinq.f32.pop %v523
        %vm527 = vweird.f32 %v431
        %v528 = vadd.s32 %v524, 3
        %v529 = vand.u32 %v528, 3
        %vm530 = vcmp.lt.s32.totalorder %v529, 2
        %vm531 = vcmp.eq.s32.totalorder %v529, 0
        %v532 = vxor.u32 %v526, 2147483648
        %v533 = vsel %vm531, %v525, %v532
        %vm534 = vcmp.eq.s32.totalorder %v529, 2
        %v535 = vxor.u32 %v525, 2147483648
        %v536 = vsel %vm534, %v535, %v526
        %v537 = vsel %vm530, %v533, %v536
        %v538 = vsel %vm527, nan, %v537
        %v539 = vand.u32 2147483647, %v432
        %vm540 = vcmp.le.f32.partialorder %v539, 0.7853982
        %vm541 = vcmp.lt.s32.totalorder %v432, 0
        %v542 = vand.u32 %v432, 2139095040
        %v543 = vshrl.u32 %v542, 23
        %v544 = vsub.s32 %v543, 127
        %v545 = vand.u32 2147483647, %v432
        %v546 = vand.u32 %v545, 8388607
        %v547 = vor.u32 %v546, 8388608
        %v548 = vsub.s32 0, %v547
        %v549 = vadd.s32 %v544, 1
        %vm550 = vcmp.gt.s32.totalorder %v549, 0
        %v551 = vsel %vm550, %v549, 0
        %v552 = vshrl.u32 %v551, 5
        %v553 = vand.u32 %v551, 31
        %v554 = vsub.s32 32, %v553
        %v555 = vshrl.u32 683565275, %v554
        %v556 = vshll.u32 683565275, %v553
        %v557 = vshrl.u32 2475754826, %v554
        %v558 = vor.u32 %v556, %v557
        %v559 = vshll.u32 2475754826, %v553
        %v560 = vshrl.u32 2131351028, %v554
        %v561 = vor.u32 %v559, %v560
        %v562 = vshll.u32 2131351028, %v553
        %v563 = vshrl.u32 2102212464, %v554
        %v564 = vor.u32 %v562, %v563
        %v565 = vshll.u32 2102212464, %v553
        %v566 = vshrl.u32 920167782, %v554
        %v567 = vor.u32 %v565, %v566
        %v568 = vshll.u32 920167782, %v553
        %v569 = vshrl.u32 1326507024, %v554
        %v570 = vor.u32 %v568, %v569
        %vm571 = vcmp.lt.s32.totalorder %v552, 1
        %vm572 = vcmp.lt.s32.totalorder %v552, 2
        %vm573 = vcmp.lt.s32.totalorder %v552, 3
        %vm574 = vcmp.lt.s32.totalorder %v552, 4
        %v575 = vsel %vm571, %v555, %v558
        %v576 = vsel %vm574, %v564, 2102212464
        %v577 = vsel %vm573, %v561, %v576
        %v578 = vsel %vm572, %v575, %v577
        %v579 = vsel %vm571, %v558, %v561
        %v580 = vsel %vm574, %v567, 920167782
        %v581 = vsel %vm573, %v564, %v580
        %v582 = vsel %vm572, %v579, %v581
        %v583 = vsel %vm571, %v561, %v564
        %v584 = vsel %vm574, %v570, 1326507024
        %v585 = vsel %vm573, %v567, %v584
        %v586 = vsel %vm572, %v583, %v585
        %v587 = vshll.u32 %v547, 8
        %v588 = vmul.u32.u64.compose %v587, %v586
        %v589 = vextract.low.u32 %v588
        %v590 = vextract.high.u32 %v588
        %v591 = vmul.u32.u64.compose %v587, %v582
        %v592 = vextract.low.u32 %v591
        %v593 = vextract.high.u32 %v591
        %v594 = vmul.u32 %v587, %v578
        %v595 = vadd.s32 %v590, %v592
        %vm596 = vc.u32 %v590, %v592
        %v597 = vadd.s32 %v593, 1
        %v598 = vsel %vm596, %v597, %v593
        %v599 = vadd.s32 %v594, %v598
        %v600 = vadd.s32 %v599, 536870912
        %v601 = vshrl.u32 %v600, 30
        %v602 = vshll.u32 %v601, 30
        %v603 = vsub.s32 %v599, %v602
        %vm604 = vcmp.lt.s32.totalorder %v603, 0
        %v605 = vsub.s32 0, %v603
        %v606 = vsel %vm604, %v605, %v603
        %v607 = vclz %v606
        %v608 = vsub.s32 %v607, 2
        %vm609 = vcmp.gt.s32.totalorder 0, %v608
        %v610 = vsel %vm609, 0, %v608
        %v611 = vsub.s32 32, %v610
        %v612 = vshll.u32 %v603, %v610
        %v613 = vshrl.u32 %v595, %v611
        %v614 = vor.u32 %v612, %v613
        %v615 = vsub.s32 4294967266, %v610
        %v616 = vadd.s32 %v615, 127
        %v617 = vshll.u32 %v616, 23
        %v618 = vor.u32 4788187, %v617
        %v619 = vand.u32 2147483647, %v618
        %v621 = vcvt.s32.f32 %v614
        %v622 = vmul.f32 %v621, %v619
        %v623 = vxor.u32 %v622, 2147483648
        %v624 = vsel %vm541, %v623, %v622
        %v625 = vsub.s32 4, %v601
        %v626 = vsel %vm541, %v625, %v601
        %v627 = vsel %vm540, %v432, %v624
        %v628 = vsel %vm540, 0, %v626
        %v629 = vcosq.f32.pop %v627
        %v630 = vsinq.f32.pop %v627
        %vm631 = vweird.f32 %v432
        %v632 = vadd.s32 %v628, 3
        %v633 = vand.u32 %v632, 3
        %vm634 = vcmp.lt.s32.totalorder %v633, 2
        %vm635 = vcmp.eq.s32.totalorder %v633, 0
        %v636 = vxor.u32 %v630, 2147483648
        %v637 = vsel %vm635, %v629, %v636
        %vm638 = vcmp.eq.s32.totalorder %v633, 2
        %v639 = vxor.u32 %v629, 2147483648
        %v640 = vsel %vm638, %v639, %v630
        %v641 = vsel %vm634, %v637, %v640
        %v642 = vsel %vm631, nan, %v641
        %v643 = vand.u32 2147483647, %v433
        %vm644 = vcmp.le.f32.partialorder %v643, 0.7853982
        %vm645 = vcmp.lt.s32.totalorder %v433, 0
        %v646 = vand.u32 %v433, 2139095040
        %v647 = vshrl.u32 %v646, 23
        %v648 = vsub.s32 %v647, 127
        %v649 = vand.u32 2147483647, %v433
        %v650 = vand.u32 %v649, 8388607
        %v651 = vor.u32 %v650, 8388608
        %v652 = vsub.s32 0, %v651
        %v653 = vadd.s32 %v648, 1
        %vm654 = vcmp.gt.s32.totalorder %v653, 0
        %v655 = vsel %vm654, %v653, 0
        %v656 = vshrl.u32 %v655, 5
        %v657 = vand.u32 %v655, 31
        %v658 = vsub.s32 32, %v657
        %v659 = vshrl.u32 683565275, %v658
        %v660 = vshll.u32 683565275, %v657
        %v661 = vshrl.u32 2475754826, %v658
        %v662 = vor.u32 %v660, %v661
        %v663 = vshll.u32 2475754826, %v657
        %v664 = vshrl.u32 2131351028, %v658
        %v665 = vor.u32 %v663, %v664
        %v666 = vshll.u32 2131351028, %v657
        %v667 = vshrl.u32 2102212464, %v658
        %v668 = vor.u32 %v666, %v667
        %v669 = vshll.u32 2102212464, %v657
        %v670 = vshrl.u32 920167782, %v658
        %v671 = vor.u32 %v669, %v670
        %v672 = vshll.u32 920167782, %v657
        %v673 = vshrl.u32 1326507024, %v658
        %v674 = vor.u32 %v672, %v673
        %vm675 = vcmp.lt.s32.totalorder %v656, 1
        %vm676 = vcmp.lt.s32.totalorder %v656, 2
        %vm677 = vcmp.lt.s32.totalorder %v656, 3
        %vm678 = vcmp.lt.s32.totalorder %v656, 4
        %v679 = vsel %vm675, %v659, %v662
        %v680 = vsel %vm678, %v668, 2102212464
        %v681 = vsel %vm677, %v665, %v680
        %v682 = vsel %vm676, %v679, %v681
        %v683 = vsel %vm675, %v662, %v665
        %v684 = vsel %vm678, %v671, 920167782
        %v685 = vsel %vm677, %v668, %v684
        %v686 = vsel %vm676, %v683, %v685
        %v687 = vsel %vm675, %v665, %v668
        %v688 = vsel %vm678, %v674, 1326507024
        %v689 = vsel %vm677, %v671, %v688
        %v690 = vsel %vm676, %v687, %v689
        %v691 = vshll.u32 %v651, 8
        %v692 = vmul.u32.u64.compose %v691, %v690
        %v693 = vextract.low.u32 %v692
        %v694 = vextract.high.u32 %v692
        %v695 = vmul.u32.u64.compose %v691, %v686
        %v696 = vextract.low.u32 %v695
        %v697 = vextract.high.u32 %v695
        %v698 = vmul.u32 %v691, %v682
        %v699 = vadd.s32 %v694, %v696
        %vm700 = vc.u32 %v694, %v696
        %v701 = vadd.s32 %v697, 1
        %v702 = vsel %vm700, %v701, %v697
        %v703 = vadd.s32 %v698, %v702
        %v704 = vadd.s32 %v703, 536870912
        %v705 = vshrl.u32 %v704, 30
        %v706 = vshll.u32 %v705, 30
        %v707 = vsub.s32 %v703, %v706
        %vm708 = vcmp.lt.s32.totalorder %v707, 0
        %v709 = vsub.s32 0, %v707
        %v710 = vsel %vm708, %v709, %v707
        %v711 = vclz %v710
        %v712 = vsub.s32 %v711, 2
        %vm713 = vcmp.gt.s32.totalorder 0, %v712
        %v714 = vsel %vm713, 0, %v712
        %v715 = vsub.s32 32, %v714
        %v716 = vshll.u32 %v707, %v714
        %v717 = vshrl.u32 %v699, %v715
        %v718 = vor.u32 %v716, %v717
        %v719 = vsub.s32 4294967266, %v714
        %v720 = vadd.s32 %v719, 127
        %v721 = vshll.u32 %v720, 23
        %v722 = vor.u32 4788187, %v721
        %v723 = vand.u32 2147483647, %v722
        %v725 = vcvt.s32.f32 %v718
        %v726 = vmul.f32 %v725, %v723
        %v727 = vxor.u32 %v726, 2147483648
        %v728 = vsel %vm645, %v727, %v726
        %v729 = vsub.s32 4, %v705
        %v730 = vsel %vm645, %v729, %v705
        %v731 = vsel %vm644, %v433, %v728
        %v732 = vsel %vm644, 0, %v730
        %v733 = vcosq.f32.pop %v731
        %v734 = vsinq.f32.pop %v731
        %vm735 = vweird.f32 %v433
        %v736 = vadd.s32 %v732, 3
        %v737 = vand.u32 %v736, 3
        %vm738 = vcmp.lt.s32.totalorder %v737, 2
        %vm739 = vcmp.eq.s32.totalorder %v737, 0
        %v740 = vxor.u32 %v734, 2147483648
        %v741 = vsel %vm739, %v733, %v740
        %vm742 = vcmp.eq.s32.totalorder %v737, 2
        %v743 = vxor.u32 %v733, 2147483648
        %v744 = vsel %vm742, %v743, %v734
        %v745 = vsel %vm738, %v741, %v744
        %v746 = vsel %vm735, nan, %v745
        %v747 = vand.u32 2147483647, %v434
        %vm748 = vcmp.le.f32.partialorder %v747, 0.7853982
        %vm749 = vcmp.lt.s32.totalorder %v434, 0
        %v750 = vand.u32 %v434, 2139095040
        %v751 = vshrl.u32 %v750, 23
        %v752 = vsub.s32 %v751, 127
        %v753 = vand.u32 2147483647, %v434
        %v754 = vand.u32 %v753, 8388607
        %v755 = vor.u32 %v754, 8388608
        %v756 = vsub.s32 0, %v755
        %v757 = vadd.s32 %v752, 1
        %vm758 = vcmp.gt.s32.totalorder %v757, 0
        %v759 = vsel %vm758, %v757, 0
        %v760 = vshrl.u32 %v759, 5
        %v761 = vand.u32 %v759, 31
        %v762 = vsub.s32 32, %v761
        %v763 = vshrl.u32 683565275, %v762
        %v764 = vshll.u32 683565275, %v761
        %v765 = vshrl.u32 2475754826, %v762
        %v766 = vor.u32 %v764, %v765
        %v767 = vshll.u32 2475754826, %v761
        %v768 = vshrl.u32 2131351028, %v762
        %v769 = vor.u32 %v767, %v768
        %v770 = vshll.u32 2131351028, %v761
        %v771 = vshrl.u32 2102212464, %v762
        %v772 = vor.u32 %v770, %v771
        %v773 = vshll.u32 2102212464, %v761
        %v774 = vshrl.u32 920167782, %v762
        %v775 = vor.u32 %v773, %v774
        %v776 = vshll.u32 920167782, %v761
        %v777 = vshrl.u32 1326507024, %v762
        %v778 = vor.u32 %v776, %v777
        %vm779 = vcmp.lt.s32.totalorder %v760, 1
        %vm780 = vcmp.lt.s32.totalorder %v760, 2
        %vm781 = vcmp.lt.s32.totalorder %v760, 3
        %vm782 = vcmp.lt.s32.totalorder %v760, 4
        %v783 = vsel %vm779, %v763, %v766
        %v784 = vsel %vm782, %v772, 2102212464
        %v785 = vsel %vm781, %v769, %v784
        %v786 = vsel %vm780, %v783, %v785
        %v787 = vsel %vm779, %v766, %v769
        %v788 = vsel %vm782, %v775, 920167782
        %v789 = vsel %vm781, %v772, %v788
        %v790 = vsel %vm780, %v787, %v789
        %v791 = vsel %vm779, %v769, %v772
        %v792 = vsel %vm782, %v778, 1326507024
        %v793 = vsel %vm781, %v775, %v792
        %v794 = vsel %vm780, %v791, %v793
        %v795 = vshll.u32 %v755, 8
        %v796 = vmul.u32.u64.compose %v795, %v794
        %v797 = vextract.low.u32 %v796
        %v798 = vextract.high.u32 %v796
        %v799 = vmul.u32.u64.compose %v795, %v790
        %v800 = vextract.low.u32 %v799
        %v801 = vextract.high.u32 %v799
        %v802 = vmul.u32 %v795, %v786
        %v803 = vadd.s32 %v798, %v800
        %vm804 = vc.u32 %v798, %v800
        %v805 = vadd.s32 %v801, 1
        %v806 = vsel %vm804, %v805, %v801
        %v807 = vadd.s32 %v802, %v806
        %v808 = vadd.s32 %v807, 536870912
        %v809 = vshrl.u32 %v808, 30
        %v810 = vshll.u32 %v809, 30
        %v811 = vsub.s32 %v807, %v810
        %vm812 = vcmp.lt.s32.totalorder %v811, 0
        %v813 = vsub.s32 0, %v811
        %v814 = vsel %vm812, %v813, %v811
        %v815 = vclz %v814
        %v816 = vsub.s32 %v815, 2
        %vm817 = vcmp.gt.s32.totalorder 0, %v816
        %v818 = vsel %vm817, 0, %v816
        %v819 = vsub.s32 32, %v818
        %v820 = vshll.u32 %v811, %v818
        %v821 = vshrl.u32 %v803, %v819
        %v822 = vor.u32 %v820, %v821
        %v823 = vsub.s32 4294967266, %v818
        %v824 = vadd.s32 %v823, 127
        %v825 = vshll.u32 %v824, 23
        %v826 = vor.u32 4788187, %v825
        %v827 = vand.u32 2147483647, %v826
        %v829 = vcvt.s32.f32 %v822
        %v830 = vmul.f32 %v829, %v827
        %v831 = vxor.u32 %v830, 2147483648
        %v832 = vsel %vm749, %v831, %v830
        %v833 = vsub.s32 4, %v809
        %v834 = vsel %vm749, %v833, %v809
        %v835 = vsel %vm748, %v434, %v832
        %v836 = vsel %vm748, 0, %v834
        %v837 = vcosq.f32.pop %v835
        %v838 = vsinq.f32.pop %v835
        %vm839 = vweird.f32 %v434
        %v840 = vadd.s32 %v836, 3
        %v841 = vand.u32 %v840, 3
        %vm842 = vcmp.lt.s32.totalorder %v841, 2
        %vm843 = vcmp.eq.s32.totalorder %v841, 0
        %v844 = vxor.u32 %v838, 2147483648
        %v845 = vsel %vm843, %v837, %v844
        %vm846 = vcmp.eq.s32.totalorder %v841, 2
        %v847 = vxor.u32 %v837, 2147483648
        %v848 = vsel %vm846, %v847, %v838
        %v849 = vsel %vm842, %v845, %v848
        %v850 = vsel %vm839, nan, %v849
        %v851 = vld [vmem:[%s4] sm:$0xff]
        %v852 = vld [vmem:[%s4 + $0x8] sm:$0xff]
        %v853 = vld [vmem:[%s4 + $0x10] sm:$0xff]
        %v854 = vld [vmem:[%s4 + $0x18] sm:$0xff]
        %v855 = vld [vmem:[%s5] sm:$0xff]
        %v856 = vld [vmem:[%s5 + $0x8] sm:$0xff]
        %v857 = vld [vmem:[%s5 + $0x10] sm:$0xff]
        %v858 = vld [vmem:[%s5 + $0x18] sm:$0xff]
        %860 = vset.pattern.permute.xlu0 0
        %861 = vperm.xlu0 %860, %v855
        %v862 = vpop.permute.xlu0 %861
        %865 = vset.pattern.permute.xlu0 0
        %866 = vperm.xlu0 %865, %v856
        %v867 = vpop.permute.xlu0 %866
        %870 = vset.pattern.permute.xlu0 0
        %871 = vperm.xlu0 %870, %v857
        %v872 = vpop.permute.xlu0 %871
        %875 = vset.pattern.permute.xlu0 0
        %876 = vperm.xlu0 %875, %v858
        %v877 = vpop.permute.xlu0 %876
        %vm879 = vcmask 261120
        %v881 = vsel %vm879, %v851, 0
        %v884 = vsel %vm879, %v852, 0
        %v887 = vsel %vm879, %v853, 0
        %v890 = vsel %vm879, %v854, 0
        %892 = vmatprep.subr.mxu0 0.0
        %893 = vmatpush1.msra.mxu0 %v538
        %894 = vmatprep.subr.mxu0 0.0
        %895 = vmatpush1.msra.mxu0 %v642
        %896 = vmatprep.subr.mxu0 0.0
        %897 = vmatpush1.msra.mxu0 %v746
        %898 = vmatprep.subr.mxu0 0.0
        %899 = vmatpush1.msra.mxu0 %v850
        %900 = vmatprep.subr.mxu0 0.0
        %901 = vmatpush1.msra.mxu0 0.0
        %902 = vmatprep.subr.mxu0 0.0
        %903 = vmatpush1.msra.mxu0 0.0
        %904 = vmatprep.subr.mxu0 0.0
        %905 = vmatpush1.msra.mxu0 0.0
        %906 = vmatprep.subr.mxu0 0.0
        %907 = vmatpush1.msra.mxu0 0.0
        %908 = vmatprep.subr.mxu0 0.0
        %909 = vmatpush1.msra.mxu0 0.0
        %910 = vmatprep.subr.mxu0 0.0
        %911 = vmatpush1.msra.mxu0 0.0
        %912 = vmatprep.subr.mxu0 0.0
        %913 = vmatpush1.msra.mxu0 0.0
        %914 = vmatprep.subr.mxu0 0.0
        %915 = vmatpush1.msra.mxu0 0.0
        %916 = vmatprep.subr.mxu0 0.0
        %917 = vmatpush1.msra.mxu0 0.0
        %918 = vmatprep.subr.mxu0 0.0
        %919 = vmatpush1.msra.mxu0 0.0
        %920 = vmatprep.subr.mxu0 0.0
        %921 = vmatpush1.msra.mxu0 0.0
        %922 = vmatprep.subr.mxu0 0.0
        %923 = vmatpush1.msra.mxu0 0.0
        %924 = vmatprep.subr.mxu0 0.0
        %925 = vmatpush1.msra.mxu0 0.0
        %926 = vmatprep.subr.mxu0 0.0
        %927 = vmatpush1.msra.mxu0 0.0
        %928 = vmatprep.subr.mxu0 0.0
        %929 = vmatpush1.msra.mxu0 0.0
        %930 = vmatprep.subr.mxu0 0.0
        %931 = vmatpush1.msra.mxu0 0.0
        %932 = vmatprep.subr.mxu0 0.0
        %933 = vmatpush1.msra.mxu0 0.0
        %934 = vmatprep.subr.mxu0 0.0
        %935 = vmatpush1.msra.mxu0 0.0
        %936 = vmatprep.subr.mxu0 0.0
        %937 = vmatpush1.msra.mxu0 0.0
        %938 = vmatprep.subr.mxu0 0.0
        %939 = vmatpush1.msra.mxu0 0.0
        %940 = vmatprep.subr.mxu0 0.0
        %941 = vmatpush1.msra.mxu0 0.0
        %942 = vmatprep.subr.mxu0 0.0
        %943 = vmatpush1.msra.mxu0 0.0
        %944 = vmatprep.subr.mxu0 0.0
        %945 = vmatpush1.msra.mxu0 0.0
        %946 = vmatprep.subr.mxu0 0.0
        %947 = vmatpush1.msra.mxu0 0.0
        %948 = vmatprep.subr.mxu0 0.0
        %949 = vmatpush1.msra.mxu0 0.0
        %950 = vmatprep.subr.mxu0 0.0
        %951 = vmatpush1.msra.mxu0 0.0
        %952 = vmatprep.subr.mxu0 0.0
        %953 = vmatpush1.msra.mxu0 0.0
        %954 = vmatprep.subr.mxu0 0.0
        %955 = vmatpush1.msra.mxu0 0.0
        %956 = vmatprep.mubr.f32.mxu0 0.0
        %957 = vmatmul.mubr.f32.gmra.mrb[0].mxu0 %v881
        %v958 = vpop.f32.mrb[0].mxu0
        %v959 = vadd.f32 %v862, %v958
        %v960 = vpop.f32.mrb[0].mxu0
        %961 = vmatprep.mubr.f32.mxu0 0.0
        %962 = vmatmul.mubr.f32.gmra.mrb[0].mxu0 %v884
        %v963 = vpop.f32.mrb[0].mxu0
        %v964 = vadd.f32 %v867, %v963
        %v965 = vpop.f32.mrb[0].mxu0
        %966 = vmatprep.mubr.f32.mxu0 0.0
        %967 = vmatmul.mubr.f32.gmra.mrb[0].mxu0 %v887
        %v968 = vpop.f32.mrb[0].mxu0
        %v969 = vadd.f32 %v872, %v968
        %v970 = vpop.f32.mrb[0].mxu0
        %971 = vmatprep.mubr.f32.mxu0 0.0
        %972 = vmatmul.mubr.f32.gmra.mrb[0].mxu0 %v890
        %v973 = vpop.f32.mrb[0].mxu0
        %v974 = vadd.f32 %v877, %v973
        %v975 = vpop.f32.mrb[0].mxu0
        %976 = vdwg.mxu0
        %v977 = vand.u32 2147483647, %v959
        %vm978 = vcmp.le.f32.partialorder %v977, 0.7853982
        %vm979 = vcmp.lt.s32.totalorder %v959, 0
        %v980 = vand.u32 %v959, 2139095040
        %v981 = vshrl.u32 %v980, 23
        %v982 = vsub.s32 %v981, 127
        %v983 = vand.u32 2147483647, %v959
        %v984 = vand.u32 %v983, 8388607
        %v985 = vor.u32 %v984, 8388608
        %v986 = vsub.s32 0, %v985
        %v987 = vadd.s32 %v982, 1
        %vm988 = vcmp.gt.s32.totalorder %v987, 0
        %v989 = vsel %vm988, %v987, 0
        %v990 = vshrl.u32 %v989, 5
        %v991 = vand.u32 %v989, 31
        %v992 = vsub.s32 32, %v991
        %v993 = vshrl.u32 683565275, %v992
        %v994 = vshll.u32 683565275, %v991
        %v995 = vshrl.u32 2475754826, %v992
        %v996 = vor.u32 %v994, %v995
        %v997 = vshll.u32 2475754826, %v991
        %v998 = vshrl.u32 2131351028, %v992
        %v999 = vor.u32 %v997, %v998
        %v1000 = vshll.u32 2131351028, %v991
        %v1001 = vshrl.u32 2102212464, %v992
        %v1002 = vor.u32 %v1000, %v1001
        %v1003 = vshll.u32 2102212464, %v991
        %v1004 = vshrl.u32 920167782, %v992
        %v1005 = vor.u32 %v1003, %v1004
        %v1006 = vshll.u32 920167782, %v991
        %v1007 = vshrl.u32 1326507024, %v992
        %v1008 = vor.u32 %v1006, %v1007
        %vm1009 = vcmp.lt.s32.totalorder %v990, 1
        %vm1010 = vcmp.lt.s32.totalorder %v990, 2
        %vm1011 = vcmp.lt.s32.totalorder %v990, 3
        %vm1012 = vcmp.lt.s32.totalorder %v990, 4
        %v1013 = vsel %vm1009, %v993, %v996
        %v1014 = vsel %vm1012, %v1002, 2102212464
        %v1015 = vsel %vm1011, %v999, %v1014
        %v1016 = vsel %vm1010, %v1013, %v1015
        %v1017 = vsel %vm1009, %v996, %v999
        %v1018 = vsel %vm1012, %v1005, 920167782
        %v1019 = vsel %vm1011, %v1002, %v1018
        %v1020 = vsel %vm1010, %v1017, %v1019
        %v1021 = vsel %vm1009, %v999, %v1002
        %v1022 = vsel %vm1012, %v1008, 1326507024
        %v1023 = vsel %vm1011, %v1005, %v1022
        %v1024 = vsel %vm1010, %v1021, %v1023
        %v1025 = vshll.u32 %v985, 8
        %v1026 = vmul.u32.u64.compose %v1025, %v1024
        %v1027 = vextract.low.u32 %v1026
        %v1028 = vextract.high.u32 %v1026
        %v1029 = vmul.u32.u64.compose %v1025, %v1020
        %v1030 = vextract.low.u32 %v1029
        %v1031 = vextract.high.u32 %v1029
        %v1032 = vmul.u32 %v1025, %v1016
        %v1033 = vadd.s32 %v1028, %v1030
        %vm1034 = vc.u32 %v1028, %v1030
        %v1035 = vadd.s32 %v1031, 1
        %v1036 = vsel %vm1034, %v1035, %v1031
        %v1037 = vadd.s32 %v1032, %v1036
        %v1038 = vadd.s32 %v1037, 536870912
        %v1039 = vshrl.u32 %v1038, 30
        %v1040 = vshll.u32 %v1039, 30
        %v1041 = vsub.s32 %v1037, %v1040
        %vm1042 = vcmp.lt.s32.totalorder %v1041, 0
        %v1043 = vsub.s32 0, %v1041
        %v1044 = vsel %vm1042, %v1043, %v1041
        %v1045 = vclz %v1044
        %v1046 = vsub.s32 %v1045, 2
        %vm1047 = vcmp.gt.s32.totalorder 0, %v1046
        %v1048 = vsel %vm1047, 0, %v1046
        %v1049 = vsub.s32 32, %v1048
        %v1050 = vshll.u32 %v1041, %v1048
        %v1051 = vshrl.u32 %v1033, %v1049
        %v1052 = vor.u32 %v1050, %v1051
        %v1053 = vsub.s32 4294967266, %v1048
        %v1054 = vadd.s32 %v1053, 127
        %v1055 = vshll.u32 %v1054, 23
        %v1056 = vor.u32 4788187, %v1055
        %v1057 = vand.u32 2147483647, %v1056
        %v1059 = vcvt.s32.f32 %v1052
        %v1060 = vmul.f32 %v1059, %v1057
        %v1061 = vxor.u32 %v1060, 2147483648
        %v1062 = vsel %vm979, %v1061, %v1060
        %v1063 = vsub.s32 4, %v1039
        %v1064 = vsel %vm979, %v1063, %v1039
        %v1065 = vsel %vm978, %v959, %v1062
        %v1066 = vsel %vm978, 0, %v1064
        %v1067 = vcosq.f32.pop %v1065
        %v1068 = vsinq.f32.pop %v1065
        %vm1069 = vweird.f32 %v959
        %v1070 = vadd.s32 %v1066, 3
        %v1071 = vand.u32 %v1070, 3
        %vm1072 = vcmp.lt.s32.totalorder %v1071, 2
        %vm1073 = vcmp.eq.s32.totalorder %v1071, 0
        %v1074 = vxor.u32 %v1068, 2147483648
        %v1075 = vsel %vm1073, %v1067, %v1074
        %vm1076 = vcmp.eq.s32.totalorder %v1071, 2
        %v1077 = vxor.u32 %v1067, 2147483648
        %v1078 = vsel %vm1076, %v1077, %v1068
        %v1079 = vsel %vm1072, %v1075, %v1078
        %v1080 = vsel %vm1069, nan, %v1079
        %v1081 = vand.u32 2147483647, %v964
        %vm1082 = vcmp.le.f32.partialorder %v1081, 0.7853982
        %vm1083 = vcmp.lt.s32.totalorder %v964, 0
        %v1084 = vand.u32 %v964, 2139095040
        %v1085 = vshrl.u32 %v1084, 23
        %v1086 = vsub.s32 %v1085, 127
        %v1087 = vand.u32 2147483647, %v964
        %v1088 = vand.u32 %v1087, 8388607
        %v1089 = vor.u32 %v1088, 8388608
        %v1090 = vsub.s32 0, %v1089
        %v1091 = vadd.s32 %v1086, 1
        %vm1092 = vcmp.gt.s32.totalorder %v1091, 0
        %v1093 = vsel %vm1092, %v1091, 0
        %v1094 = vshrl.u32 %v1093, 5
        %v1095 = vand.u32 %v1093, 31
        %v1096 = vsub.s32 32, %v1095
        %v1097 = vshrl.u32 683565275, %v1096
        %v1098 = vshll.u32 683565275, %v1095
        %v1099 = vshrl.u32 2475754826, %v1096
        %v1100 = vor.u32 %v1098, %v1099
        %v1101 = vshll.u32 2475754826, %v1095
        %v1102 = vshrl.u32 2131351028, %v1096
        %v1103 = vor.u32 %v1101, %v1102
        %v1104 = vshll.u32 2131351028, %v1095
        %v1105 = vshrl.u32 2102212464, %v1096
        %v1106 = vor.u32 %v1104, %v1105
        %v1107 = vshll.u32 2102212464, %v1095
        %v1108 = vshrl.u32 920167782, %v1096
        %v1109 = vor.u32 %v1107, %v1108
        %v1110 = vshll.u32 920167782, %v1095
        %v1111 = vshrl.u32 1326507024, %v1096
        %v1112 = vor.u32 %v1110, %v1111
        %vm1113 = vcmp.lt.s32.totalorder %v1094, 1
        %vm1114 = vcmp.lt.s32.totalorder %v1094, 2
        %vm1115 = vcmp.lt.s32.totalorder %v1094, 3
        %vm1116 = vcmp.lt.s32.totalorder %v1094, 4
        %v1117 = vsel %vm1113, %v1097, %v1100
        %v1118 = vsel %vm1116, %v1106, 2102212464
        %v1119 = vsel %vm1115, %v1103, %v1118
        %v1120 = vsel %vm1114, %v1117, %v1119
        %v1121 = vsel %vm1113, %v1100, %v1103
        %v1122 = vsel %vm1116, %v1109, 920167782
        %v1123 = vsel %vm1115, %v1106, %v1122
        %v1124 = vsel %vm1114, %v1121, %v1123
        %v1125 = vsel %vm1113, %v1103, %v1106
        %v1126 = vsel %vm1116, %v1112, 1326507024
        %v1127 = vsel %vm1115, %v1109, %v1126
        %v1128 = vsel %vm1114, %v1125, %v1127
        %v1129 = vshll.u32 %v1089, 8
        %v1130 = vmul.u32.u64.compose %v1129, %v1128
        %v1131 = vextract.low.u32 %v1130
        %v1132 = vextract.high.u32 %v1130
        %v1133 = vmul.u32.u64.compose %v1129, %v1124
        %v1134 = vextract.low.u32 %v1133
        %v1135 = vextract.high.u32 %v1133
        %v1136 = vmul.u32 %v1129, %v1120
        %v1137 = vadd.s32 %v1132, %v1134
        %vm1138 = vc.u32 %v1132, %v1134
        %v1139 = vadd.s32 %v1135, 1
        %v1140 = vsel %vm1138, %v1139, %v1135
        %v1141 = vadd.s32 %v1136, %v1140
        %v1142 = vadd.s32 %v1141, 536870912
        %v1143 = vshrl.u32 %v1142, 30
        %v1144 = vshll.u32 %v1143, 30
        %v1145 = vsub.s32 %v1141, %v1144
        %vm1146 = vcmp.lt.s32.totalorder %v1145, 0
        %v1147 = vsub.s32 0, %v1145
        %v1148 = vsel %vm1146, %v1147, %v1145
        %v1149 = vclz %v1148
        %v1150 = vsub.s32 %v1149, 2
        %vm1151 = vcmp.gt.s32.totalorder 0, %v1150
        %v1152 = vsel %vm1151, 0, %v1150
        %v1153 = vsub.s32 32, %v1152
        %v1154 = vshll.u32 %v1145, %v1152
        %v1155 = vshrl.u32 %v1137, %v1153
        %v1156 = vor.u32 %v1154, %v1155
        %v1157 = vsub.s32 4294967266, %v1152
        %v1158 = vadd.s32 %v1157, 127
        %v1159 = vshll.u32 %v1158, 23
        %v1160 = vor.u32 4788187, %v1159
        %v1161 = vand.u32 2147483647, %v1160
        %v1163 = vcvt.s32.f32 %v1156
        %v1164 = vmul.f32 %v1163, %v1161
        %v1165 = vxor.u32 %v1164, 2147483648
        %v1166 = vsel %vm1083, %v1165, %v1164
        %v1167 = vsub.s32 4, %v1143
        %v1168 = vsel %vm1083, %v1167, %v1143
        %v1169 = vsel %vm1082, %v964, %v1166
        %v1170 = vsel %vm1082, 0, %v1168
        %v1171 = vcosq.f32.pop %v1169
        %v1172 = vsinq.f32.pop %v1169
        %vm1173 = vweird.f32 %v964
        %v1174 = vadd.s32 %v1170, 3
        %v1175 = vand.u32 %v1174, 3
        %vm1176 = vcmp.lt.s32.totalorder %v1175, 2
        %vm1177 = vcmp.eq.s32.totalorder %v1175, 0
        %v1178 = vxor.u32 %v1172, 2147483648
        %v1179 = vsel %vm1177, %v1171, %v1178
        %vm1180 = vcmp.eq.s32.totalorder %v1175, 2
        %v1181 = vxor.u32 %v1171, 2147483648
        %v1182 = vsel %vm1180, %v1181, %v1172
        %v1183 = vsel %vm1176, %v1179, %v1182
        %v1184 = vsel %vm1173, nan, %v1183
        %v1185 = vand.u32 2147483647, %v969
        %vm1186 = vcmp.le.f32.partialorder %v1185, 0.7853982
        %vm1187 = vcmp.lt.s32.totalorder %v969, 0
        %v1188 = vand.u32 %v969, 2139095040
        %v1189 = vshrl.u32 %v1188, 23
        %v1190 = vsub.s32 %v1189, 127
        %v1191 = vand.u32 2147483647, %v969
        %v1192 = vand.u32 %v1191, 8388607
        %v1193 = vor.u32 %v1192, 8388608
        %v1194 = vsub.s32 0, %v1193
        %v1195 = vadd.s32 %v1190, 1
        %vm1196 = vcmp.gt.s32.totalorder %v1195, 0
        %v1197 = vsel %vm1196, %v1195, 0
        %v1198 = vshrl.u32 %v1197, 5
        %v1199 = vand.u32 %v1197, 31
        %v1200 = vsub.s32 32, %v1199
        %v1201 = vshrl.u32 683565275, %v1200
        %v1202 = vshll.u32 683565275, %v1199
        %v1203 = vshrl.u32 2475754826, %v1200
        %v1204 = vor.u32 %v1202, %v1203
        %v1205 = vshll.u32 2475754826, %v1199
        %v1206 = vshrl.u32 2131351028, %v1200
        %v1207 = vor.u32 %v1205, %v1206
        %v1208 = vshll.u32 2131351028, %v1199
        %v1209 = vshrl.u32 2102212464, %v1200
        %v1210 = vor.u32 %v1208, %v1209
        %v1211 = vshll.u32 2102212464, %v1199
        %v1212 = vshrl.u32 920167782, %v1200
        %v1213 = vor.u32 %v1211, %v1212
        %v1214 = vshll.u32 920167782, %v1199
        %v1215 = vshrl.u32 1326507024, %v1200
        %v1216 = vor.u32 %v1214, %v1215
        %vm1217 = vcmp.lt.s32.totalorder %v1198, 1
        %vm1218 = vcmp.lt.s32.totalorder %v1198, 2
        %vm1219 = vcmp.lt.s32.totalorder %v1198, 3
        %vm1220 = vcmp.lt.s32.totalorder %v1198, 4
        %v1221 = vsel %vm1217, %v1201, %v1204
        %v1222 = vsel %vm1220, %v1210, 2102212464
        %v1223 = vsel %vm1219, %v1207, %v1222
        %v1224 = vsel %vm1218, %v1221, %v1223
        %v1225 = vsel %vm1217, %v1204, %v1207
        %v1226 = vsel %vm1220, %v1213, 920167782
        %v1227 = vsel %vm1219, %v1210, %v1226
        %v1228 = vsel %vm1218, %v1225, %v1227
        %v1229 = vsel %vm1217, %v1207, %v1210
        %v1230 = vsel %vm1220, %v1216, 1326507024
        %v1231 = vsel %vm1219, %v1213, %v1230
        %v1232 = vsel %vm1218, %v1229, %v1231
        %v1233 = vshll.u32 %v1193, 8
        %v1234 = vmul.u32.u64.compose %v1233, %v1232
        %v1235 = vextract.low.u32 %v1234
        %v1236 = vextract.high.u32 %v1234
        %v1237 = vmul.u32.u64.compose %v1233, %v1228
        %v1238 = vextract.low.u32 %v1237
        %v1239 = vextract.high.u32 %v1237
        %v1240 = vmul.u32 %v1233, %v1224
        %v1241 = vadd.s32 %v1236, %v1238
        %vm1242 = vc.u32 %v1236, %v1238
        %v1243 = vadd.s32 %v1239, 1
        %v1244 = vsel %vm1242, %v1243, %v1239
        %v1245 = vadd.s32 %v1240, %v1244
        %v1246 = vadd.s32 %v1245, 536870912
        %v1247 = vshrl.u32 %v1246, 30
        %v1248 = vshll.u32 %v1247, 30
        %v1249 = vsub.s32 %v1245, %v1248
        %vm1250 = vcmp.lt.s32.totalorder %v1249, 0
        %v1251 = vsub.s32 0, %v1249
        %v1252 = vsel %vm1250, %v1251, %v1249
        %v1253 = vclz %v1252
        %v1254 = vsub.s32 %v1253, 2
        %vm1255 = vcmp.gt.s32.totalorder 0, %v1254
        %v1256 = vsel %vm1255, 0, %v1254
        %v1257 = vsub.s32 32, %v1256
        %v1258 = vshll.u32 %v1249, %v1256
        %v1259 = vshrl.u32 %v1241, %v1257
        %v1260 = vor.u32 %v1258, %v1259
        %v1261 = vsub.s32 4294967266, %v1256
        %v1262 = vadd.s32 %v1261, 127
        %v1263 = vshll.u32 %v1262, 23
        %v1264 = vor.u32 4788187, %v1263
        %v1265 = vand.u32 2147483647, %v1264
        %v1267 = vcvt.s32.f32 %v1260
        %v1268 = vmul.f32 %v1267, %v1265
        %v1269 = vxor.u32 %v1268, 2147483648
        %v1270 = vsel %vm1187, %v1269, %v1268
        %v1271 = vsub.s32 4, %v1247
        %v1272 = vsel %vm1187, %v1271, %v1247
        %v1273 = vsel %vm1186, %v969, %v1270
        %v1274 = vsel %vm1186, 0, %v1272
        %v1275 = vcosq.f32.pop %v1273
        %v1276 = vsinq.f32.pop %v1273
        %vm1277 = vweird.f32 %v969
        %v1278 = vadd.s32 %v1274, 3
        %v1279 = vand.u32 %v1278, 3
        %vm1280 = vcmp.lt.s32.totalorder %v1279, 2
        %vm1281 = vcmp.eq.s32.totalorder %v1279, 0
        %v1282 = vxor.u32 %v1276, 2147483648
        %v1283 = vsel %vm1281, %v1275, %v1282
        %vm1284 = vcmp.eq.s32.totalorder %v1279, 2
        %v1285 = vxor.u32 %v1275, 2147483648
        %v1286 = vsel %vm1284, %v1285, %v1276
        %v1287 = vsel %vm1280, %v1283, %v1286
        %v1288 = vsel %vm1277, nan, %v1287
        %v1289 = vand.u32 2147483647, %v974
        %vm1290 = vcmp.le.f32.partialorder %v1289, 0.7853982
        %vm1291 = vcmp.lt.s32.totalorder %v974, 0
        %v1292 = vand.u32 %v974, 2139095040
        %v1293 = vshrl.u32 %v1292, 23
        %v1294 = vsub.s32 %v1293, 127
        %v1295 = vand.u32 2147483647, %v974
        %v1296 = vand.u32 %v1295, 8388607
        %v1297 = vor.u32 %v1296, 8388608
        %v1298 = vsub.s32 0, %v1297
        %v1299 = vadd.s32 %v1294, 1
        %vm1300 = vcmp.gt.s32.totalorder %v1299, 0
        %v1301 = vsel %vm1300, %v1299, 0
        %v1302 = vshrl.u32 %v1301, 5
        %v1303 = vand.u32 %v1301, 31
        %v1304 = vsub.s32 32, %v1303
        %v1305 = vshrl.u32 683565275, %v1304
        %v1306 = vshll.u32 683565275, %v1303
        %v1307 = vshrl.u32 2475754826, %v1304
        %v1308 = vor.u32 %v1306, %v1307
        %v1309 = vshll.u32 2475754826, %v1303
        %v1310 = vshrl.u32 2131351028, %v1304
        %v1311 = vor.u32 %v1309, %v1310
        %v1312 = vshll.u32 2131351028, %v1303
        %v1313 = vshrl.u32 2102212464, %v1304
        %v1314 = vor.u32 %v1312, %v1313
        %v1315 = vshll.u32 2102212464, %v1303
        %v1316 = vshrl.u32 920167782, %v1304
        %v1317 = vor.u32 %v1315, %v1316
        %v1318 = vshll.u32 920167782, %v1303
        %v1319 = vshrl.u32 1326507024, %v1304
        %v1320 = vor.u32 %v1318, %v1319
        %vm1321 = vcmp.lt.s32.totalorder %v1302, 1
        %vm1322 = vcmp.lt.s32.totalorder %v1302, 2
        %vm1323 = vcmp.lt.s32.totalorder %v1302, 3
        %vm1324 = vcmp.lt.s32.totalorder %v1302, 4
        %v1325 = vsel %vm1321, %v1305, %v1308
        %v1326 = vsel %vm1324, %v1314, 2102212464
        %v1327 = vsel %vm1323, %v1311, %v1326
        %v1328 = vsel %vm1322, %v1325, %v1327
        %v1329 = vsel %vm1321, %v1308, %v1311
        %v1330 = vsel %vm1324, %v1317, 920167782
        %v1331 = vsel %vm1323, %v1314, %v1330
        %v1332 = vsel %vm1322, %v1329, %v1331
        %v1333 = vsel %vm1321, %v1311, %v1314
        %v1334 = vsel %vm1324, %v1320, 1326507024
        %v1335 = vsel %vm1323, %v1317, %v1334
        %v1336 = vsel %vm1322, %v1333, %v1335
        %v1337 = vshll.u32 %v1297, 8
        %v1338 = vmul.u32.u64.compose %v1337, %v1336
        %v1339 = vextract.low.u32 %v1338
        %v1340 = vextract.high.u32 %v1338
        %v1341 = vmul.u32.u64.compose %v1337, %v1332
        %v1342 = vextract.low.u32 %v1341
        %v1343 = vextract.high.u32 %v1341
        %v1344 = vmul.u32 %v1337, %v1328
        %v1345 = vadd.s32 %v1340, %v1342
        %vm1346 = vc.u32 %v1340, %v1342
        %v1347 = vadd.s32 %v1343, 1
        %v1348 = vsel %vm1346, %v1347, %v1343
        %v1349 = vadd.s32 %v1344, %v1348
        %v1350 = vadd.s32 %v1349, 536870912
        %v1351 = vshrl.u32 %v1350, 30
        %v1352 = vshll.u32 %v1351, 30
        %v1353 = vsub.s32 %v1349, %v1352
        %vm1354 = vcmp.lt.s32.totalorder %v1353, 0
        %v1355 = vsub.s32 0, %v1353
        %v1356 = vsel %vm1354, %v1355, %v1353
        %v1357 = vclz %v1356
        %v1358 = vsub.s32 %v1357, 2
        %vm1359 = vcmp.gt.s32.totalorder 0, %v1358
        %v1360 = vsel %vm1359, 0, %v1358
        %v1361 = vsub.s32 32, %v1360
        %v1362 = vshll.u32 %v1353, %v1360
        %v1363 = vshrl.u32 %v1345, %v1361
        %v1364 = vor.u32 %v1362, %v1363
        %v1365 = vsub.s32 4294967266, %v1360
        %v1366 = vadd.s32 %v1365, 127
        %v1367 = vshll.u32 %v1366, 23
        %v1368 = vor.u32 4788187, %v1367
        %v1369 = vand.u32 2147483647, %v1368
        %v1371 = vcvt.s32.f32 %v1364
        %v1372 = vmul.f32 %v1371, %v1369
        %v1373 = vxor.u32 %v1372, 2147483648
        %v1374 = vsel %vm1291, %v1373, %v1372
        %v1375 = vsub.s32 4, %v1351
        %v1376 = vsel %vm1291, %v1375, %v1351
        %v1377 = vsel %vm1290, %v974, %v1374
        %v1378 = vsel %vm1290, 0, %v1376
        %v1379 = vcosq.f32.pop %v1377
        %v1380 = vsinq.f32.pop %v1377
        %vm1381 = vweird.f32 %v974
        %v1382 = vadd.s32 %v1378, 3
        %v1383 = vand.u32 %v1382, 3
        %vm1384 = vcmp.lt.s32.totalorder %v1383, 2
        %vm1385 = vcmp.eq.s32.totalorder %v1383, 0
        %v1386 = vxor.u32 %v1380, 2147483648
        %v1387 = vsel %vm1385, %v1379, %v1386
        %vm1388 = vcmp.eq.s32.totalorder %v1383, 2
        %v1389 = vxor.u32 %v1379, 2147483648
        %v1390 = vsel %vm1388, %v1389, %v1380
        %v1391 = vsel %vm1384, %v1387, %v1390
        %v1392 = vsel %vm1381, nan, %v1391
        %v1393 = vld [vmem:[%s6] sm:$0x7]
        %v1394 = vld [vmem:[%s7] sm:$0x7]
        %1396 = vset.pattern.permute.xlu0 0
        %1397 = vperm.xlu0 %1396, %v1394
        %v1398 = vpop.permute.xlu0 %1397
        %v1401 = vsel %vm879, %v1393, 0
        %1403 = vmatprep.subr.mxu0 0.0
        %1404 = vmatpush1.msra.mxu0 %v1080
        %1405 = vmatprep.subr.mxu0 0.0
        %1406 = vmatpush1.msra.mxu0 %v1184
        %1407 = vmatprep.subr.mxu0 0.0
        %1408 = vmatpush1.msra.mxu0 %v1288
        %1409 = vmatprep.subr.mxu0 0.0
        %1410 = vmatpush1.msra.mxu0 %v1392
        %1411 = vmatprep.subr.mxu0 0.0
        %1412 = vmatpush1.msra.mxu0 0.0
        %1413 = vmatprep.subr.mxu0 0.0
        %1414 = vmatpush1.msra.mxu0 0.0
        %1415 = vmatprep.subr.mxu0 0.0
        %1416 = vmatpush1.msra.mxu0 0.0
        %1417 = vmatprep.subr.mxu0 0.0
        %1418 = vmatpush1.msra.mxu0 0.0
        %1419 = vmatprep.subr.mxu0 0.0
        %1420 = vmatpush1.msra.mxu0 0.0
        %1421 = vmatprep.subr.mxu0 0.0
        %1422 = vmatpush1.msra.mxu0 0.0
        %1423 = vmatprep.subr.mxu0 0.0
        %1424 = vmatpush1.msra.mxu0 0.0
        %1425 = vmatprep.subr.mxu0 0.0
        %1426 = vmatpush1.msra.mxu0 0.0
        %1427 = vmatprep.subr.mxu0 0.0
        %1428 = vmatpush1.msra.mxu0 0.0
        %1429 = vmatprep.subr.mxu0 0.0
        %1430 = vmatpush1.msra.mxu0 0.0
        %1431 = vmatprep.subr.mxu0 0.0
        %1432 = vmatpush1.msra.mxu0 0.0
        %1433 = vmatprep.subr.mxu0 0.0
        %1434 = vmatpush1.msra.mxu0 0.0
        %1435 = vmatprep.subr.mxu0 0.0
        %1436 = vmatpush1.msra.mxu0 0.0
        %1437 = vmatprep.subr.mxu0 0.0
        %1438 = vmatpush1.msra.mxu0 0.0
        %1439 = vmatprep.subr.mxu0 0.0
        %1440 = vmatpush1.msra.mxu0 0.0
        %1441 = vmatprep.subr.mxu0 0.0
        %1442 = vmatpush1.msra.mxu0 0.0
        %1443 = vmatprep.subr.mxu0 0.0
        %1444 = vmatpush1.msra.mxu0 0.0
        %1445 = vmatprep.subr.mxu0 0.0
        %1446 = vmatpush1.msra.mxu0 0.0
        %1447 = vmatprep.subr.mxu0 0.0
        %1448 = vmatpush1.msra.mxu0 0.0
        %1449 = vmatprep.subr.mxu0 0.0
        %1450 = vmatpush1.msra.mxu0 0.0
        %1451 = vmatprep.subr.mxu0 0.0
        %1452 = vmatpush1.msra.mxu0 0.0
        %1453 = vmatprep.subr.mxu0 0.0
        %1454 = vmatpush1.msra.mxu0 0.0
        %1455 = vmatprep.subr.mxu0 0.0
        %1456 = vmatpush1.msra.mxu0 0.0
        %1457 = vmatprep.subr.mxu0 0.0
        %1458 = vmatpush1.msra.mxu0 0.0
        %1459 = vmatprep.subr.mxu0 0.0
        %1460 = vmatpush1.msra.mxu0 0.0
        %1461 = vmatprep.subr.mxu0 0.0
        %1462 = vmatpush1.msra.mxu0 0.0
        %1463 = vmatprep.subr.mxu0 0.0
        %1464 = vmatpush1.msra.mxu0 0.0
        %1465 = vmatprep.subr.mxu0 0.0
        %1466 = vmatpush1.msra.mxu0 0.0
        %1467 = vmatprep.mubr.f32.mxu0 0.0
        %1468 = vmatmul.mubr.f32.gmra.mrb[0].mxu0 %v1401
        %v1469 = vpop.f32.mrb[0].mxu0
        %v1470 = vadd.f32 %v1398, %v1469
        %v1471 = vpop.f32.mrb[0].mxu0
        %1472 = vdwg.mxu0
        %1473 = vst [vmem:[%s307] sm:$0x7] %v1470
        %s1474 = sand.u32 %s208, 1
        %s1475 = scalar_lea.sflag [#allocation3], %s1474
        %s1476 = sand.u32 %s208, 1
        %s1477 = smul.addr %s1476, 4
        %s1478 = scalar_lea.vmem [#allocation2], %s1477
        // Predicated region
        $region53: #{tpu_custom_call.1} parent=51 // pred_check
          %p1479 = pneg %p218
        $region54: #{tpu_custom_call.1} parent=51 // pred_check_branch
          %1481 = sbr.rel (%p1479) target = $region56
        $region55: #{tpu_custom_call.1} parent=51 // pred_region
          %s1483 = ssub.s32 64, 64
          %1484 = vsyncadd %s1475, %s1483
          %s1485 = smul.addr %s22, 64
          %s1486 = scalar_lea.hbm %s8, %s1485
          %s1488 = sshll.u32 %s1478, 4
          %s1489 = int_to_ptr.vmem [resolvable:$true] %s1488
          %1491 = dma.vmem_to_hbm [thread:$0]  %s1489, 64, %s1486, %s1475
        $region56: #{tpu_custom_call.1} parent=51 // pred_fallthru
          _
      $region52: #{tpu_custom_call.1} parent=5 // pred_fallthru
        _
      %p1492 = scmp.le.s32.totalorder 2, %s17
      // Predicated region
      $region57: #{tpu_custom_call.1} parent=5 // pred_check
        %p1493 = pneg %p1492
      $region58: #{tpu_custom_call.1} parent=5 // pred_check_branch
        %1495 = sbr.rel (%p1493) target = $region60
      $region59: #{tpu_custom_call.1} parent=5 // pred_region
        %s1496 = ssub.s32 %s17, 2
        // Predicated region
        $region61: #{tpu_custom_call.1} parent=59 // pred_check
          %p1497 = pneg %p224
        $region62: #{tpu_custom_call.1} parent=59 // pred_check_branch
          %1499 = sbr.rel (%p1497) target = $region64
        $region63: #{tpu_custom_call.1} parent=59 // pred_region
          %s1500 = sand.u32 %s209, 1
          %s1501 = scalar_lea.sflag [#allocation3], %s1500
          %s1502 = sand.u32 %s209, 1
          %s1503 = smul.addr %s1502, 4
          %s1504 = scalar_lea.vmem [#allocation2], %s1503
          %1505 = dma.done %s1501, 64
        $region64: #{tpu_custom_call.1} parent=59 // pred_fallthru
          _
      $region60: #{tpu_custom_call.1} parent=5 // pred_fallthru
        _
    $region6: #{tpu_custom_call.1} parent=1 // loop_footer
      %s21 = sadd.s32 1, %s17
    $region7: #{tpu_custom_call.1} parent=1 // loop_footer_branch
      %16 = sbr.rel target = $region3
    $region8: #{tpu_custom_call.1} parent=1 // loop_exit
      _
    %1506 = vsyncpa [#allocation3], 1
    %s1507 = scalar_lea.sflag [#allocation3], 1
    %1508 = vsyncpa %s1507, 1

</llo_original>
